<compile_context>
chip_gen: v7x
topology: tpu7x:2x2x1
jax: 0.10.0
libtpu: 0.0.40
codegen_flags: <defaults>
</compile_context>

<pallas_src>
import jax
import jax.numpy as jnp
import numpy as np
from jax import lax
from jax.experimental import pallas as pl
from jax.experimental.pallas import tpu as pltpu

_LANE = 128
_SUB = 8
_PPR = 128                               # points per VMEM row (lane groups of dx_pad)
_TARGET_TB = 2048                        # target rows (of 128 points) per grid step
_VMEM_BLOCK_BUDGET = 20 * 1024 * 1024    # budget for the double-buffered in/out blocks
_VMEM_LIMIT = 32 * 1024 * 1024           # safe on v5e/v6e/v7x


def _rbf_matmul_kernel(w_ref, x_ref, o_ref):
    # w_ref: (128*dx_pad, 128*dout) f32, constant across the grid
    # x_ref: (TB, 128*dx_pad)       native dtype, lane-dense interleaved points
    # o_ref: (TB, 128*dout)         lane-dense, point-major
    x = x_ref[...].astype(jnp.float32)
    dist = jnp.dot(x, w_ref[...],
                   preferred_element_type=jnp.float32,
                   precision=lax.Precision.HIGHEST)        # keep f32 semantics
    o_ref[...] = (-0.5 * dist * dist).astype(o_ref.dtype)


def _round_up(x, n):
    return ((x + n - 1) // n) * n


def _next_pow2(x):
    return 1 << (max(x, 1) - 1).bit_length()


def rbf_kernel_forward(diff, lengthscale_param):
    """diff: [m, n1, n2, dx], lengthscale_param: [dx, dout] -> [m, n1, n2, dout]."""
    m, n1, n2, dx = diff.shape
    dx_p, dout = lengthscale_param.shape
    assert dx == dx_p
    out_dtype = diff.dtype

    # TODO(synk): in_dim > 128 would make a point span multiple VMEM rows; the fused
    # kron-matmul layout below does not cover that (unrealistic for this module).
    assert dx <= _LANE, "RBFKernel Pallas kernel supports in_dim <= 128"

    # lengthscale = 1e-5 + softplus(param); kernel consumes its reciprocal.
    lengthscale = 1e-5 + jax.nn.softplus(lengthscale_param.astype(jnp.float32))
    inv_ls = (1.0 / lengthscale).astype(jnp.float32)                  # (dx, dout)

    # Pad channels to a divisor of 128 (next power of two) so 128 points tile one row.
    dx_pad = _next_pow2(dx)
    inv_ls_pad = inv_ls if dx_pad == dx else jnp.pad(inv_ls, ((0, dx_pad - dx), (0, 0)))

    # W[dx_pad*p + c, dout*p + o] = inv_ls[c, o]  ->  x_row @ W = per-point dist,
    # already compacted to dense lanes in point-major order.
    w = jnp.kron(jnp.eye(_PPR, dtype=jnp.float32), inv_ls_pad)  # (128*dx_pad, 128*dout)

    M = m * n1 * n2
    row_w = _PPR * dx_pad
    out_w = _PPR * dout

    # Natural interleaved layout; pad only if needed (zero copies in the aligned case).
    M_pad = _round_up(M, _PPR)
    x2 = diff.reshape(M, dx)
    if (M_pad, dx_pad) != (M, dx):
        x2 = jnp.pad(x2, ((0, M_pad - M), (0, dx_pad - dx)))
    R = M_pad // _PPR
    x2 = x2.reshape(R, row_w)     # free: contiguous row-major reinterpretation

    # Tile-row count: big tiles (per-step overhead), >=4 grid steps when possible
    # (v7x megacore = 2 TCs sharing the "parallel" axis), VMEM byte budget for dout>1.
    in_b = jnp.dtype(x2.dtype).itemsize
    out_b = jnp.dtype(out_dtype).itemsize
    cap = _VMEM_BLOCK_BUDGET // (2 * (row_w * in_b + out_w * out_b))
    cap = max(_SUB, (cap // _SUB) * _SUB)
    if R >= 4 * _SUB:
        tb = max(_SUB, min(_TARGET_TB, cap, (R // 4) // _SUB * _SUB))
    else:
        tb = R            # single block == full array rows (always a legal block shape)

    grid = (pl.cdiv(R, tb),)   # partial last block is clipped by Pallas (no round-up pad)

    out2 = pl.pallas_call(
        _rbf_matmul_kernel,
        out_shape=jax.ShapeDtypeStruct((R, out_w), out_dtype),
        grid_spec=pltpu.PrefetchScalarGridSpec(
            num_scalar_prefetch=0,
            grid=grid,
            in_specs=[
                pl.BlockSpec((row_w, out_w), lambda i: (0, 0)),   # W: constant block
                pl.BlockSpec((tb, row_w), lambda i: (i, 0)),      # interleaved points
            ],
            out_specs=pl.BlockSpec((tb, out_w), lambda i: (i, 0)),
        ),
        compiler_params=pltpu.CompilerParams(
            dimension_semantics=("parallel",),
            vmem_limit_bytes=_VMEM_LIMIT),
    )(w, x2)

    # Output is already point-major: flat index = point*dout + o.  Slice only copies
    # when phantom points were padded in; otherwise this epilogue is free.
    out_flat = out2.reshape(-1)
    if M_pad != M:
        out_flat = out_flat[: M * dout]
    return out_flat.reshape(m, n1, n2, dout)


def _reference(diff, lengthscale_param):
    lengthscale = 1e-5 + jax.nn.softplus(lengthscale_param.astype(jnp.float32))
    d = diff.astype(jnp.float32)[..., None]                       # [m,n1,n2,dx,1]
    dist = (d / lengthscale[None, None, None]).sum(-2)            # [m,n1,n2,dout]
    return -0.5 * dist ** 2.0


if __name__ == "__main__":
    def make_param(in_dim, out_dim, init_lengthscale=0.1):
        # Deterministic init matching the module: softplus^{-1}(init_lengthscale)
        ls = jnp.full((in_dim, out_dim), init_lengthscale, dtype=jnp.float32)
        return jnp.log(jnp.exp(ls) - 1.0)

    key = jax.random.PRNGKey(0)
    cases = [
        # (m, n1, n2, dx, dout, dtype, rtol, atol)
        (2, 32, 32, 4, 1, jnp.float32, 1e-5, 1e-5),   # aligned: zero-copy wrapper
        (2, 66, 32, 4, 1, jnp.float32, 1e-5, 1e-5),   # >=4 grid steps + clipped last block
        (3, 11, 31, 4, 2, jnp.float32, 1e-5, 1e-5),   # ragged M (phantom-point pad), dout>1
        (2, 17, 9, 3, 1, jnp.float32, 1e-5, 1e-5),    # dx not a power of two (channel pad)
        (2, 16, 16, 4, 1, jnp.bfloat16, 2e-2, 1e-2),  # bf16 in / bf16 out path
    ]
    for (m, n1, n2, dx, dout, dt, rtol, atol) in cases:
        key, k = jax.random.split(key)
        diff = jax.random.normal(k, (m, n1, n2, dx), dtype=jnp.float32).astype(dt)
        param = make_param(dx, dout)

        out = jax.block_until_ready(rbf_kernel_forward(diff, param))
        ref = _reference(diff, param)

        assert out.shape == (m, n1, n2, dout)
        assert out.dtype == dt
        np.testing.assert_allclose(np.asarray(out.astype(jnp.float32)),
                                   np.asarray(ref),
                                   rtol=rtol, atol=atol)
    print("KERNEL_OK")
</pallas_src>

<mosaic_0001>
module attributes {stable_mosaic.version = 11 : i64} {
  func.func @_rbf_matmul_kernel(%arg0: i32, %arg1: memref<512x128xf32, #tpu.memory_space<vmem>>, %arg2: memref<16x512xf32, #tpu.memory_space<vmem>>, %arg3: memref<16x128xf32, #tpu.memory_space<vmem>>) attributes {dimension_semantics = [#tpu.dimension_semantics<parallel>], iteration_bounds = array<i64: 1>, scalar_prefetch = 0 : i64, scratch_operands = 0 : i64, tpu.core_type = #tpu.core_type<tc>, window_params = [{pipeline_mode = #tpu.pipeline_mode<synchronous>, transform_indices = @transform_0, window_bounds = array<i64: 512, 128>}, {transform_indices = @transform_1, window_bounds = array<i64: 16, 512>}, {transform_indices = @transform_2, window_bounds = array<i64: 16, 128>}]} {
    %c0 = arith.constant 0 : index
    %c0_0 = arith.constant 0 : index
    %0 = vector.load %arg2[%c0, %c0_0] : memref<16x512xf32, #tpu.memory_space<vmem>>, vector<16x512xf32>
    %c0_1 = arith.constant 0 : index
    %c0_2 = arith.constant 0 : index
    %1 = vector.load %arg1[%c0_1, %c0_2] : memref<512x128xf32, #tpu.memory_space<vmem>>, vector<512x128xf32>
    %cst = arith.constant dense<0.000000e+00> : vector<16x128xf32>
    %2 = tpu.matmul %0, %1, %cst {dimension_numbers = #tpu.dot_dimension_numbers<[1], [0], [0], [1], [0, 0, 1, 1], [], []>, precision = #tpu.contract_precision<fp32>} : vector<16x512xf32>, vector<512x128xf32>, vector<16x128xf32> -> vector<16x128xf32>
    %cst_3 = arith.constant -5.000000e-01 : f32
    %3 = vector.broadcast %cst_3 : f32 to vector<16x128xf32>
    %4 = arith.mulf %3, %2 : vector<16x128xf32>
    %5 = arith.mulf %4, %2 : vector<16x128xf32>
    %c0_4 = arith.constant 0 : index
    %c0_5 = arith.constant 0 : index
    %6 = vector.load %arg3[%c0_4, %c0_5] : memref<16x128xf32, #tpu.memory_space<vmem>>, vector<16x128xf32>
    tpu.vector_store %arg3[%c0_4, %c0_5], %5 {strides = array<i32>} : memref<16x128xf32, #tpu.memory_space<vmem>>, vector<16x128xf32>,
    return
  }
  func.func @transform_0(%arg0: i32) -> (i32, i32) {
    %c0_i32 = arith.constant 0 : i32
    %c0_i32_0 = arith.constant 0 : i32
    %c0_i32_1 = arith.constant 0 : i32
    return %c0_i32, %c0_i32_0 : i32, i32
  }
  func.func @transform_1(%arg0: i32) -> (i32, i32) {
    %c0_i32 = arith.constant 0 : i32
    %c0_i32_0 = arith.constant 0 : i32
    return %arg0, %c0_i32 : i32, i32
  }
  func.func @transform_2(%arg0: i32) -> (i32, i32) {
    %c0_i32 = arith.constant 0 : i32
    %c0_i32_0 = arith.constant 0 : i32
    return %arg0, %c0_i32 : i32, i32
  }
}

</mosaic_0001>

<llo_original>
// kernel: tpu_custom_call.1
$region0: #{tpu_custom_call.1}
  #allocation0 [shape = 'u32[]', space=smem, size = 0x4, offset = 0x4, fixed_abs, tag = 'smem constant byte address 0x4 - core index']
  #allocation1 [shape = 'u32[144,128]{1,0:T(1,128)}', space=vmem, size = 0x12000, scoped, tag = 'internal scratch']
  %s0 = inlined_call_operand.hbm [shape: f32[512,128], index: 0, kind: input, shape index: {}]
  %s1 = inlined_call_operand.hbm [shape: f32[16,512], index: 1, kind: input, shape index: {}]
  %s2 = inlined_call_operand.hbm [shape: f32[16,128], index: 2, kind: output, shape index: {}]
  %s3 = sld [smem:[#allocation0]]
  $region26: #{tpu_custom_call.1} parent=0
    _
  %s5 = ssub.s32 1, %s3
  %s6 = scalar_select 0, %s5, %s3
  $region1: #{tpu_custom_call.1} parent=0
    #allocation2 [shape = 'u8[262144]{0}', space=vmem, size = 0x40000, scoped, tag = 'input window, operand 0, single buffered']
    #allocation3 [shape = 's32[1]{0}', space=sflag, size = 0x4, scoped, tag = 'scoped memory for tpu_custom_call.1']
    #allocation4 [shape = 's32[1]{0}', space=sflag, size = 0x4, scoped, tag = 'scoped memory for tpu_custom_call.1']
    #allocation5 [shape = 'u8[32768]{0}', space=vmem, size = 0x8000, scoped, tag = 'input window, operand 1, single buffered']
    #allocation6 [shape = 's32[1]{0}', space=sflag, size = 0x4, scoped, tag = 'scoped memory for tpu_custom_call.1']
    #allocation7 [shape = 'u8[8192]{0}', space=vmem, size = 0x2000, scoped, tag = 'output window, operand 0, single buffered']
    %7 = vsyncpa [#allocation3], 0
    %8 = vsyncpa [#allocation6], 0
    %9 = vsyncpa [#allocation4], 0
    // Predicated region
    $region2: #{tpu_custom_call.1} parent=1 // pred_check
      _
    $region3: #{tpu_custom_call.1} parent=1 // pred_check_branch
      %11 = sbr.rel (0) target = $region5
    $region4: #{tpu_custom_call.1} parent=1 // pred_region
      %s13 = ssub.s32 8192, 8192
      %14 = vsyncadd [#allocation3], %s13
      %s15 = sshll.u32 [#allocation2], 4
      %s16 = int_to_ptr.vmem [resolvable:$true] %s15
      %21 = dma.hbm_to_vmem [thread:$0]  %s0, 8192, %s16, [#allocation3], 128, 128, 8
    $region5: #{tpu_custom_call.1} parent=1 // pred_fallthru
      _
    // Predicated region
    $region6: #{tpu_custom_call.1} parent=1 // pred_check
      _
    $region7: #{tpu_custom_call.1} parent=1 // pred_check_branch
      %23 = sbr.rel (0) target = $region9
    $region8: #{tpu_custom_call.1} parent=1 // pred_region
      %s25 = ssub.s32 1024, 1024
      %26 = vsyncadd [#allocation6], %s25
      %s27 = sshll.u32 [#allocation5], 4
      %s28 = int_to_ptr.vmem [resolvable:$true] %s27
      %33 = dma.hbm_to_vmem [thread:$0]  %s1, 1024, %s28, [#allocation6], 512, 512, 32
    $region9: #{tpu_custom_call.1} parent=1 // pred_fallthru
      _
    // Predicated region
    $region10: #{tpu_custom_call.1} parent=1 // pred_check
      _
    $region11: #{tpu_custom_call.1} parent=1 // pred_check_branch
      %35 = sbr.rel (0) target = $region13
    $region12: #{tpu_custom_call.1} parent=1 // pred_region
      %36 = dma.done [#allocation3], 8192
    $region13: #{tpu_custom_call.1} parent=1 // pred_fallthru
      _
    // Predicated region
    $region14: #{tpu_custom_call.1} parent=1 // pred_check
      _
    $region15: #{tpu_custom_call.1} parent=1 // pred_check_branch
      %38 = sbr.rel (0) target = $region17
    $region16: #{tpu_custom_call.1} parent=1 // pred_region
      %39 = dma.done [#allocation6], 1024
    $region17: #{tpu_custom_call.1} parent=1 // pred_fallthru
      _
    %v40 = vld [vmem:[#allocation5] sm:$0xff]
    %v41 = vld [vmem:[#allocation5 + $0x8] sm:$0xff]
    %v42 = vld [vmem:[#allocation5 + $0x10] sm:$0xff]
    %v43 = vld [vmem:[#allocation5 + $0x18] sm:$0xff]
    %v44 = vld [vmem:[#allocation5 + $0x20] sm:$0xff]
    %v45 = vld [vmem:[#allocation5 + $0x28] sm:$0xff]
    %v46 = vld [vmem:[#allocation5 + $0x30] sm:$0xff]
    %v47 = vld [vmem:[#allocation5 + $0x38] sm:$0xff]
    %v48 = vld [vmem:[#allocation2] sm:$0xff]
    %v49 = vld [vmem:[#allocation2 + $0x8] sm:$0xff]
    %v50 = vld [vmem:[#allocation2 + $0x10] sm:$0xff]
    %v51 = vld [vmem:[#allocation2 + $0x18] sm:$0xff]
    %v52 = vld [vmem:[#allocation2 + $0x20] sm:$0xff]
    %v53 = vld [vmem:[#allocation2 + $0x28] sm:$0xff]
    %v54 = vld [vmem:[#allocation2 + $0x30] sm:$0xff]
    %v55 = vld [vmem:[#allocation2 + $0x38] sm:$0xff]
    %v56 = vld [vmem:[#allocation2 + $0x40] sm:$0xff]
    %v57 = vld [vmem:[#allocation2 + $0x48] sm:$0xff]
    %v58 = vld [vmem:[#allocation2 + $0x50] sm:$0xff]
    %v59 = vld [vmem:[#allocation2 + $0x58] sm:$0xff]
    %v60 = vld [vmem:[#allocation2 + $0x60] sm:$0xff]
    %v61 = vld [vmem:[#allocation2 + $0x68] sm:$0xff]
    %v62 = vld [vmem:[#allocation2 + $0x70] sm:$0xff]
    %v63 = vld [vmem:[#allocation2 + $0x78] sm:$0xff]
    %v64 = vld [vmem:[#allocation2 + $0x80] sm:$0xff]
    %v65 = vld [vmem:[#allocation2 + $0x88] sm:$0xff]
    %v66 = vld [vmem:[#allocation2 + $0x90] sm:$0xff]
    %v67 = vld [vmem:[#allocation2 + $0x98] sm:$0xff]
    %v68 = vld [vmem:[#allocation2 + $0xa0] sm:$0xff]
    %v69 = vld [vmem:[#allocation2 + $0xa8] sm:$0xff]
    %v70 = vld [vmem:[#allocation2 + $0xb0] sm:$0xff]
    %v71 = vld [vmem:[#allocation2 + $0xb8] sm:$0xff]
    %v72 = vld [vmem:[#allocation2 + $0xc0] sm:$0xff]
    %v73 = vld [vmem:[#allocation2 + $0xc8] sm:$0xff]
    %v74 = vld [vmem:[#allocation2 + $0xd0] sm:$0xff]
    %v75 = vld [vmem:[#allocation2 + $0xd8] sm:$0xff]
    %v76 = vld [vmem:[#allocation2 + $0xe0] sm:$0xff]
    %v77 = vld [vmem:[#allocation2 + $0xe8] sm:$0xff]
    %v78 = vld [vmem:[#allocation2 + $0xf0] sm:$0xff]
    %v79 = vld [vmem:[#allocation2 + $0xf8] sm:$0xff]
    %v80 = vld [vmem:[#allocation2 + $0x100] sm:$0xff]
    %v81 = vld [vmem:[#allocation2 + $0x108] sm:$0xff]
    %v82 = vld [vmem:[#allocation2 + $0x110] sm:$0xff]
    %v83 = vld [vmem:[#allocation2 + $0x118] sm:$0xff]
    %v84 = vld [vmem:[#allocation2 + $0x120] sm:$0xff]
    %v85 = vld [vmem:[#allocation2 + $0x128] sm:$0xff]
    %v86 = vld [vmem:[#allocation2 + $0x130] sm:$0xff]
    %v87 = vld [vmem:[#allocation2 + $0x138] sm:$0xff]
    %v88 = vld [vmem:[#allocation2 + $0x140] sm:$0xff]
    %v89 = vld [vmem:[#allocation2 + $0x148] sm:$0xff]
    %v90 = vld [vmem:[#allocation2 + $0x150] sm:$0xff]
    %v91 = vld [vmem:[#allocation2 + $0x158] sm:$0xff]
    %v92 = vld [vmem:[#allocation2 + $0x160] sm:$0xff]
    %v93 = vld [vmem:[#allocation2 + $0x168] sm:$0xff]
    %v94 = vld [vmem:[#allocation2 + $0x170] sm:$0xff]
    %v95 = vld [vmem:[#allocation2 + $0x178] sm:$0xff]
    %v96 = vld [vmem:[#allocation2 + $0x180] sm:$0xff]
    %v97 = vld [vmem:[#allocation2 + $0x188] sm:$0xff]
    %v98 = vld [vmem:[#allocation2 + $0x190] sm:$0xff]
    %v99 = vld [vmem:[#allocation2 + $0x198] sm:$0xff]
    %v100 = vld [vmem:[#allocation2 + $0x1a0] sm:$0xff]
    %v101 = vld [vmem:[#allocation2 + $0x1a8] sm:$0xff]
    %v102 = vld [vmem:[#allocation2 + $0x1b0] sm:$0xff]
    %v103 = vld [vmem:[#allocation2 + $0x1b8] sm:$0xff]
    %v104 = vld [vmem:[#allocation2 + $0x1c0] sm:$0xff]
    %v105 = vld [vmem:[#allocation2 + $0x1c8] sm:$0xff]
    %v106 = vld [vmem:[#allocation2 + $0x1d0] sm:$0xff]
    %v107 = vld [vmem:[#allocation2 + $0x1d8] sm:$0xff]
    %v108 = vld [vmem:[#allocation2 + $0x1e0] sm:$0xff]
    %v109 = vld [vmem:[#allocation2 + $0x1e8] sm:$0xff]
    %v110 = vld [vmem:[#allocation2 + $0x1f0] sm:$0xff]
    %v111 = vld [vmem:[#allocation2 + $0x1f8] sm:$0xff]
    %112 = vmatprep.subr.mxu0 0.0
    %v113 = vand.u32 %v48, 4294901760
    %114 = vmatpush1.msra.mxu0 %v113
    %115 = vmatprep.subr.mxu0 0.0
    %v116 = vand.u32 %v49, 4294901760
    %117 = vmatpush1.msra.mxu0 %v116
    %118 = vmatprep.subr.mxu0 0.0
    %v119 = vand.u32 %v50, 4294901760
    %120 = vmatpush1.msra.mxu0 %v119
    %121 = vmatprep.subr.mxu0 0.0
    %v122 = vand.u32 %v51, 4294901760
    %123 = vmatpush1.msra.mxu0 %v122
    %124 = vmatprep.subr.mxu0 0.0
    %v125 = vand.u32 %v52, 4294901760
    %126 = vmatpush1.msra.mxu0 %v125
    %127 = vmatprep.subr.mxu0 0.0
    %v128 = vand.u32 %v53, 4294901760
    %129 = vmatpush1.msra.mxu0 %v128
    %130 = vmatprep.subr.mxu0 0.0
    %v131 = vand.u32 %v54, 4294901760
    %132 = vmatpush1.msra.mxu0 %v131
    %133 = vmatprep.subr.mxu0 0.0
    %v134 = vand.u32 %v55, 4294901760
    %135 = vmatpush1.msra.mxu0 %v134
    %136 = vmatprep.subr.mxu0 0.0
    %v137 = vand.u32 %v56, 4294901760
    %138 = vmatpush1.msra.mxu0 %v137
    %139 = vmatprep.subr.mxu0 0.0
    %v140 = vand.u32 %v57, 4294901760
    %141 = vmatpush1.msra.mxu0 %v140
    %142 = vmatprep.subr.mxu0 0.0
    %v143 = vand.u32 %v58, 4294901760
    %144 = vmatpush1.msra.mxu0 %v143
    %145 = vmatprep.subr.mxu0 0.0
    %v146 = vand.u32 %v59, 4294901760
    %147 = vmatpush1.msra.mxu0 %v146
    %148 = vmatprep.subr.mxu0 0.0
    %v149 = vand.u32 %v60, 4294901760
    %150 = vmatpush1.msra.mxu0 %v149
    %151 = vmatprep.subr.mxu0 0.0
    %v152 = vand.u32 %v61, 4294901760
    %153 = vmatpush1.msra.mxu0 %v152
    %154 = vmatprep.subr.mxu0 0.0
    %v155 = vand.u32 %v62, 4294901760
    %156 = vmatpush1.msra.mxu0 %v155
    %157 = vmatprep.subr.mxu0 0.0
    %v158 = vand.u32 %v63, 4294901760
    %159 = vmatpush1.msra.mxu0 %v158
    %160 = vmatprep.subr.mxu0 0.0
    %v161 = vand.u32 %v64, 4294901760
    %162 = vmatpush1.msra.mxu0 %v161
    %163 = vmatprep.subr.mxu0 0.0
    %v164 = vand.u32 %v65, 4294901760
    %165 = vmatpush1.msra.mxu0 %v164
    %166 = vmatprep.subr.mxu0 0.0
    %v167 = vand.u32 %v66, 4294901760
    %168 = vmatpush1.msra.mxu0 %v167
    %169 = vmatprep.subr.mxu0 0.0
    %v170 = vand.u32 %v67, 4294901760
    %171 = vmatpush1.msra.mxu0 %v170
    %172 = vmatprep.subr.mxu0 0.0
    %v173 = vand.u32 %v68, 4294901760
    %174 = vmatpush1.msra.mxu0 %v173
    %175 = vmatprep.subr.mxu0 0.0
    %v176 = vand.u32 %v69, 4294901760
    %177 = vmatpush1.msra.mxu0 %v176
    %178 = vmatprep.subr.mxu0 0.0
    %v179 = vand.u32 %v70, 4294901760
    %180 = vmatpush1.msra.mxu0 %v179
    %181 = vmatprep.subr.mxu0 0.0
    %v182 = vand.u32 %v71, 4294901760
    %183 = vmatpush1.msra.mxu0 %v182
    %184 = vmatprep.subr.mxu0 0.0
    %v185 = vand.u32 %v72, 4294901760
    %186 = vmatpush1.msra.mxu0 %v185
    %187 = vmatprep.subr.mxu0 0.0
    %v188 = vand.u32 %v73, 4294901760
    %189 = vmatpush1.msra.mxu0 %v188
    %190 = vmatprep.subr.mxu0 0.0
    %v191 = vand.u32 %v74, 4294901760
    %192 = vmatpush1.msra.mxu0 %v191
    %193 = vmatprep.subr.mxu0 0.0
    %v194 = vand.u32 %v75, 4294901760
    %195 = vmatpush1.msra.mxu0 %v194
    %196 = vmatprep.subr.mxu0 0.0
    %v197 = vand.u32 %v76, 4294901760
    %198 = vmatpush1.msra.mxu0 %v197
    %199 = vmatprep.subr.mxu0 0.0
    %v200 = vand.u32 %v77, 4294901760
    %201 = vmatpush1.msra.mxu0 %v200
    %202 = vmatprep.subr.mxu0 0.0
    %v203 = vand.u32 %v78, 4294901760
    %204 = vmatpush1.msra.mxu0 %v203
    %205 = vmatprep.subr.mxu0 0.0
    %v206 = vand.u32 %v79, 4294901760
    %207 = vmatpush1.msra.mxu0 %v206
    %v208 = vand.u32 %v41, 4294901760
    %v209 = vsub.f32 %v41, %v208
    %v210 = vand.u32 %v209, 4294901760
    %v211 = vsub.f32 %v209, %v210
    %v212 = vand.u32 %v211, 4294901760
    %213 = vmatprep.mubr.f32.mxu0 %v212
    %v214 = vand.u32 %v40, 4294901760
    %v215 = vsub.f32 %v40, %v214
    %v216 = vand.u32 %v215, 4294901760
    %v217 = vsub.f32 %v215, %v216
    %v218 = vand.u32 %v217, 4294901760
    %219 = vmatmul.mubr.f32.gmra.mrb[0].mxu0 %v218
    %v220 = vpop.f32.mrb[0].mxu0
    %v221 = vadd.f32 0.0, %v220
    %v222 = vpop.f32.mrb[0].mxu0
    %v223 = vand.u32 %v45, 4294901760
    %v224 = vsub.f32 %v45, %v223
    %v225 = vand.u32 %v224, 4294901760
    %v226 = vsub.f32 %v224, %v225
    %v227 = vand.u32 %v226, 4294901760
    %228 = vmatprep.mubr.f32.mxu0 %v227
    %v229 = vand.u32 %v44, 4294901760
    %v230 = vsub.f32 %v44, %v229
    %v231 = vand.u32 %v230, 4294901760
    %v232 = vsub.f32 %v230, %v231
    %v233 = vand.u32 %v232, 4294901760
    %234 = vmatmul.mubr.f32.gmra.mrb[0].mxu0 %v233
    %v235 = vpop.f32.mrb[0].mxu0
    %v236 = vadd.f32 0.0, %v235
    %v237 = vpop.f32.mrb[0].mxu0
    %238 = vdwg.mxu0
    %239 = vmatprep.subr.mxu0 0.0
    %v240 = vand.u32 %v48, 4294901760
    %v241 = vsub.f32 %v48, %v240
    %v242 = vand.u32 %v241, 4294901760
    %v243 = vsub.f32 %v241, %v242
    %v244 = vand.u32 %v243, 4294901760
    %245 = vmatpush1.msra.mxu0 %v244
    %246 = vmatprep.subr.mxu0 0.0
    %v247 = vand.u32 %v49, 4294901760
    %v248 = vsub.f32 %v49, %v247
    %v249 = vand.u32 %v248, 4294901760
    %v250 = vsub.f32 %v248, %v249
    %v251 = vand.u32 %v250, 4294901760
    %252 = vmatpush1.msra.mxu0 %v251
    %253 = vmatprep.subr.mxu0 0.0
    %v254 = vand.u32 %v50, 4294901760
    %v255 = vsub.f32 %v50, %v254
    %v256 = vand.u32 %v255, 4294901760
    %v257 = vsub.f32 %v255, %v256
    %v258 = vand.u32 %v257, 4294901760
    %259 = vmatpush1.msra.mxu0 %v258
    %260 = vmatprep.subr.mxu0 0.0
    %v261 = vand.u32 %v51, 4294901760
    %v262 = vsub.f32 %v51, %v261
    %v263 = vand.u32 %v262, 4294901760
    %v264 = vsub.f32 %v262, %v263
    %v265 = vand.u32 %v264, 4294901760
    %266 = vmatpush1.msra.mxu0 %v265
    %267 = vmatprep.subr.mxu0 0.0
    %v268 = vand.u32 %v52, 4294901760
    %v269 = vsub.f32 %v52, %v268
    %v270 = vand.u32 %v269, 4294901760
    %v271 = vsub.f32 %v269, %v270
    %v272 = vand.u32 %v271, 4294901760
    %273 = vmatpush1.msra.mxu0 %v272
    %274 = vmatprep.subr.mxu0 0.0
    %v275 = vand.u32 %v53, 4294901760
    %v276 = vsub.f32 %v53, %v275
    %v277 = vand.u32 %v276, 4294901760
    %v278 = vsub.f32 %v276, %v277
    %v279 = vand.u32 %v278, 4294901760
    %280 = vmatpush1.msra.mxu0 %v279
    %281 = vmatprep.subr.mxu0 0.0
    %v282 = vand.u32 %v54, 4294901760
    %v283 = vsub.f32 %v54, %v282
    %v284 = vand.u32 %v283, 4294901760
    %v285 = vsub.f32 %v283, %v284
    %v286 = vand.u32 %v285, 4294901760
    %287 = vmatpush1.msra.mxu0 %v286
    %288 = vmatprep.subr.mxu0 0.0
    %v289 = vand.u32 %v55, 4294901760
    %v290 = vsub.f32 %v55, %v289
    %v291 = vand.u32 %v290, 4294901760
    %v292 = vsub.f32 %v290, %v291
    %v293 = vand.u32 %v292, 4294901760
    %294 = vmatpush1.msra.mxu0 %v293
    %295 = vmatprep.subr.mxu0 0.0
    %v296 = vand.u32 %v56, 4294901760
    %v297 = vsub.f32 %v56, %v296
    %v298 = vand.u32 %v297, 4294901760
    %v299 = vsub.f32 %v297, %v298
    %v300 = vand.u32 %v299, 4294901760
    %301 = vmatpush1.msra.mxu0 %v300
    %302 = vmatprep.subr.mxu0 0.0
    %v303 = vand.u32 %v57, 4294901760
    %v304 = vsub.f32 %v57, %v303
    %v305 = vand.u32 %v304, 4294901760
    %v306 = vsub.f32 %v304, %v305
    %v307 = vand.u32 %v306, 4294901760
    %308 = vmatpush1.msra.mxu0 %v307
    %309 = vmatprep.subr.mxu0 0.0
    %v310 = vand.u32 %v58, 4294901760
    %v311 = vsub.f32 %v58, %v310
    %v312 = vand.u32 %v311, 4294901760
    %v313 = vsub.f32 %v311, %v312
    %v314 = vand.u32 %v313, 4294901760
    %315 = vmatpush1.msra.mxu0 %v314
    %316 = vmatprep.subr.mxu0 0.0
    %v317 = vand.u32 %v59, 4294901760
    %v318 = vsub.f32 %v59, %v317
    %v319 = vand.u32 %v318, 4294901760
    %v320 = vsub.f32 %v318, %v319
    %v321 = vand.u32 %v320, 4294901760
    %322 = vmatpush1.msra.mxu0 %v321
    %323 = vmatprep.subr.mxu0 0.0
    %v324 = vand.u32 %v60, 4294901760
    %v325 = vsub.f32 %v60, %v324
    %v326 = vand.u32 %v325, 4294901760
    %v327 = vsub.f32 %v325, %v326
    %v328 = vand.u32 %v327, 4294901760
    %329 = vmatpush1.msra.mxu0 %v328
    %330 = vmatprep.subr.mxu0 0.0
    %v331 = vand.u32 %v61, 4294901760
    %v332 = vsub.f32 %v61, %v331
    %v333 = vand.u32 %v332, 4294901760
    %v334 = vsub.f32 %v332, %v333
    %v335 = vand.u32 %v334, 4294901760
    %336 = vmatpush1.msra.mxu0 %v335
    %337 = vmatprep.subr.mxu0 0.0
    %v338 = vand.u32 %v62, 4294901760
    %v339 = vsub.f32 %v62, %v338
    %v340 = vand.u32 %v339, 4294901760
    %v341 = vsub.f32 %v339, %v340
    %v342 = vand.u32 %v341, 4294901760
    %343 = vmatpush1.msra.mxu0 %v342
    %344 = vmatprep.subr.mxu0 0.0
    %v345 = vand.u32 %v63, 4294901760
    %v346 = vsub.f32 %v63, %v345
    %v347 = vand.u32 %v346, 4294901760
    %v348 = vsub.f32 %v346, %v347
    %v349 = vand.u32 %v348, 4294901760
    %350 = vmatpush1.msra.mxu0 %v349
    %351 = vmatprep.subr.mxu0 0.0
    %v352 = vand.u32 %v64, 4294901760
    %v353 = vsub.f32 %v64, %v352
    %v354 = vand.u32 %v353, 4294901760
    %v355 = vsub.f32 %v353, %v354
    %v356 = vand.u32 %v355, 4294901760
    %357 = vmatpush1.msra.mxu0 %v356
    %358 = vmatprep.subr.mxu0 0.0
    %v359 = vand.u32 %v65, 4294901760
    %v360 = vsub.f32 %v65, %v359
    %v361 = vand.u32 %v360, 4294901760
    %v362 = vsub.f32 %v360, %v361
    %v363 = vand.u32 %v362, 4294901760
    %364 = vmatpush1.msra.mxu0 %v363
    %365 = vmatprep.subr.mxu0 0.0
    %v366 = vand.u32 %v66, 4294901760
    %v367 = vsub.f32 %v66, %v366
    %v368 = vand.u32 %v367, 4294901760
    %v369 = vsub.f32 %v367, %v368
    %v370 = vand.u32 %v369, 4294901760
    %371 = vmatpush1.msra.mxu0 %v370
    %372 = vmatprep.subr.mxu0 0.0
    %v373 = vand.u32 %v67, 4294901760
    %v374 = vsub.f32 %v67, %v373
    %v375 = vand.u32 %v374, 4294901760
    %v376 = vsub.f32 %v374, %v375
    %v377 = vand.u32 %v376, 4294901760
    %378 = vmatpush1.msra.mxu0 %v377
    %379 = vmatprep.subr.mxu0 0.0
    %v380 = vand.u32 %v68, 4294901760
    %v381 = vsub.f32 %v68, %v380
    %v382 = vand.u32 %v381, 4294901760
    %v383 = vsub.f32 %v381, %v382
    %v384 = vand.u32 %v383, 4294901760
    %385 = vmatpush1.msra.mxu0 %v384
    %386 = vmatprep.subr.mxu0 0.0
    %v387 = vand.u32 %v69, 4294901760
    %v388 = vsub.f32 %v69, %v387
    %v389 = vand.u32 %v388, 4294901760
    %v390 = vsub.f32 %v388, %v389
    %v391 = vand.u32 %v390, 4294901760
    %392 = vmatpush1.msra.mxu0 %v391
    %393 = vmatprep.subr.mxu0 0.0
    %v394 = vand.u32 %v70, 4294901760
    %v395 = vsub.f32 %v70, %v394
    %v396 = vand.u32 %v395, 4294901760
    %v397 = vsub.f32 %v395, %v396
    %v398 = vand.u32 %v397, 4294901760
    %399 = vmatpush1.msra.mxu0 %v398
    %400 = vmatprep.subr.mxu0 0.0
    %v401 = vand.u32 %v71, 4294901760
    %v402 = vsub.f32 %v71, %v401
    %v403 = vand.u32 %v402, 4294901760
    %v404 = vsub.f32 %v402, %v403
    %v405 = vand.u32 %v404, 4294901760
    %406 = vmatpush1.msra.mxu0 %v405
    %407 = vmatprep.subr.mxu0 0.0
    %v408 = vand.u32 %v72, 4294901760
    %v409 = vsub.f32 %v72, %v408
    %v410 = vand.u32 %v409, 4294901760
    %v411 = vsub.f32 %v409, %v410
    %v412 = vand.u32 %v411, 4294901760
    %413 = vmatpush1.msra.mxu0 %v412
    %414 = vmatprep.subr.mxu0 0.0
    %v415 = vand.u32 %v73, 4294901760
    %v416 = vsub.f32 %v73, %v415
    %v417 = vand.u32 %v416, 4294901760
    %v418 = vsub.f32 %v416, %v417
    %v419 = vand.u32 %v418, 4294901760
    %420 = vmatpush1.msra.mxu0 %v419
    %421 = vmatprep.subr.mxu0 0.0
    %v422 = vand.u32 %v74, 4294901760
    %v423 = vsub.f32 %v74, %v422
    %v424 = vand.u32 %v423, 4294901760
    %v425 = vsub.f32 %v423, %v424
    %v426 = vand.u32 %v425, 4294901760
    %427 = vmatpush1.msra.mxu0 %v426
    %428 = vmatprep.subr.mxu0 0.0
    %v429 = vand.u32 %v75, 4294901760
    %v430 = vsub.f32 %v75, %v429
    %v431 = vand.u32 %v430, 4294901760
    %v432 = vsub.f32 %v430, %v431
    %v433 = vand.u32 %v432, 4294901760
    %434 = vmatpush1.msra.mxu0 %v433
    %435 = vmatprep.subr.mxu0 0.0
    %v436 = vand.u32 %v76, 4294901760
    %v437 = vsub.f32 %v76, %v436
    %v438 = vand.u32 %v437, 4294901760
    %v439 = vsub.f32 %v437, %v438
    %v440 = vand.u32 %v439, 4294901760
    %441 = vmatpush1.msra.mxu0 %v440
    %442 = vmatprep.subr.mxu0 0.0
    %v443 = vand.u32 %v77, 4294901760
    %v444 = vsub.f32 %v77, %v443
    %v445 = vand.u32 %v444, 4294901760
    %v446 = vsub.f32 %v444, %v445
    %v447 = vand.u32 %v446, 4294901760
    %448 = vmatpush1.msra.mxu0 %v447
    %449 = vmatprep.subr.mxu0 0.0
    %v450 = vand.u32 %v78, 4294901760
    %v451 = vsub.f32 %v78, %v450
    %v452 = vand.u32 %v451, 4294901760
    %v453 = vsub.f32 %v451, %v452
    %v454 = vand.u32 %v453, 4294901760
    %455 = vmatpush1.msra.mxu0 %v454
    %456 = vmatprep.subr.mxu0 0.0
    %v457 = vand.u32 %v79, 4294901760
    %v458 = vsub.f32 %v79, %v457
    %v459 = vand.u32 %v458, 4294901760
    %v460 = vsub.f32 %v458, %v459
    %v461 = vand.u32 %v460, 4294901760
    %462 = vmatpush1.msra.mxu0 %v461
    %v463 = vand.u32 %v41, 4294901760
    %464 = vmatprep.mubr.f32.mxu0 %v463
    %v465 = vand.u32 %v40, 4294901760
    %466 = vmatmul.mubr.f32.gmra.mrb[0].mxu0 %v465
    %v467 = vpop.f32.mrb[0].mxu0
    %v468 = vadd.f32 %v221, %v467
    %v469 = vpop.f32.mrb[0].mxu0
    %v470 = vand.u32 %v45, 4294901760
    %471 = vmatprep.mubr.f32.mxu0 %v470
    %v472 = vand.u32 %v44, 4294901760
    %473 = vmatmul.mubr.f32.gmra.mrb[0].mxu0 %v472
    %v474 = vpop.f32.mrb[0].mxu0
    %v475 = vadd.f32 %v236, %v474
    %v476 = vpop.f32.mrb[0].mxu0
    %477 = vdwg.mxu0
    %478 = vmatprep.subr.mxu0 0.0
    %v479 = vand.u32 %v48, 4294901760
    %v480 = vsub.f32 %v48, %v479
    %481 = vmatpush1.msra.mxu0 %v480
    %482 = vmatprep.subr.mxu0 0.0
    %v483 = vand.u32 %v49, 4294901760
    %v484 = vsub.f32 %v49, %v483
    %485 = vmatpush1.msra.mxu0 %v484
    %486 = vmatprep.subr.mxu0 0.0
    %v487 = vand.u32 %v50, 4294901760
    %v488 = vsub.f32 %v50, %v487
    %489 = vmatpush1.msra.mxu0 %v488
    %490 = vmatprep.subr.mxu0 0.0
    %v491 = vand.u32 %v51, 4294901760
    %v492 = vsub.f32 %v51, %v491
    %493 = vmatpush1.msra.mxu0 %v492
    %494 = vmatprep.subr.mxu0 0.0
    %v495 = vand.u32 %v52, 4294901760
    %v496 = vsub.f32 %v52, %v495
    %497 = vmatpush1.msra.mxu0 %v496
    %498 = vmatprep.subr.mxu0 0.0
    %v499 = vand.u32 %v53, 4294901760
    %v500 = vsub.f32 %v53, %v499
    %501 = vmatpush1.msra.mxu0 %v500
    %502 = vmatprep.subr.mxu0 0.0
    %v503 = vand.u32 %v54, 4294901760
    %v504 = vsub.f32 %v54, %v503
    %505 = vmatpush1.msra.mxu0 %v504
    %506 = vmatprep.subr.mxu0 0.0
    %v507 = vand.u32 %v55, 4294901760
    %v508 = vsub.f32 %v55, %v507
    %509 = vmatpush1.msra.mxu0 %v508
    %510 = vmatprep.subr.mxu0 0.0
    %v511 = vand.u32 %v56, 4294901760
    %v512 = vsub.f32 %v56, %v511
    %513 = vmatpush1.msra.mxu0 %v512
    %514 = vmatprep.subr.mxu0 0.0
    %v515 = vand.u32 %v57, 4294901760
    %v516 = vsub.f32 %v57, %v515
    %517 = vmatpush1.msra.mxu0 %v516
    %518 = vmatprep.subr.mxu0 0.0
    %v519 = vand.u32 %v58, 4294901760
    %v520 = vsub.f32 %v58, %v519
    %521 = vmatpush1.msra.mxu0 %v520
    %522 = vmatprep.subr.mxu0 0.0
    %v523 = vand.u32 %v59, 4294901760
    %v524 = vsub.f32 %v59, %v523
    %525 = vmatpush1.msra.mxu0 %v524
    %526 = vmatprep.subr.mxu0 0.0
    %v527 = vand.u32 %v60, 4294901760
    %v528 = vsub.f32 %v60, %v527
    %529 = vmatpush1.msra.mxu0 %v528
    %530 = vmatprep.subr.mxu0 0.0
    %v531 = vand.u32 %v61, 4294901760
    %v532 = vsub.f32 %v61, %v531
    %533 = vmatpush1.msra.mxu0 %v532
    %534 = vmatprep.subr.mxu0 0.0
    %v535 = vand.u32 %v62, 4294901760
    %v536 = vsub.f32 %v62, %v535
    %537 = vmatpush1.msra.mxu0 %v536
    %538 = vmatprep.subr.mxu0 0.0
    %v539 = vand.u32 %v63, 4294901760
    %v540 = vsub.f32 %v63, %v539
    %541 = vmatpush1.msra.mxu0 %v540
    %542 = vmatprep.subr.mxu0 0.0
    %v543 = vand.u32 %v64, 4294901760
    %v544 = vsub.f32 %v64, %v543
    %545 = vmatpush1.msra.mxu0 %v544
    %546 = vmatprep.subr.mxu0 0.0
    %v547 = vand.u32 %v65, 4294901760
    %v548 = vsub.f32 %v65, %v547
    %549 = vmatpush1.msra.mxu0 %v548
    %550 = vmatprep.subr.mxu0 0.0
    %v551 = vand.u32 %v66, 4294901760
    %v552 = vsub.f32 %v66, %v551
    %553 = vmatpush1.msra.mxu0 %v552
    %554 = vmatprep.subr.mxu0 0.0
    %v555 = vand.u32 %v67, 4294901760
    %v556 = vsub.f32 %v67, %v555
    %557 = vmatpush1.msra.mxu0 %v556
    %558 = vmatprep.subr.mxu0 0.0
    %v559 = vand.u32 %v68, 4294901760
    %v560 = vsub.f32 %v68, %v559
    %561 = vmatpush1.msra.mxu0 %v560
    %562 = vmatprep.subr.mxu0 0.0
    %v563 = vand.u32 %v69, 4294901760
    %v564 = vsub.f32 %v69, %v563
    %565 = vmatpush1.msra.mxu0 %v564
    %566 = vmatprep.subr.mxu0 0.0
    %v567 = vand.u32 %v70, 4294901760
    %v568 = vsub.f32 %v70, %v567
    %569 = vmatpush1.msra.mxu0 %v568
    %570 = vmatprep.subr.mxu0 0.0
    %v571 = vand.u32 %v71, 4294901760
    %v572 = vsub.f32 %v71, %v571
    %573 = vmatpush1.msra.mxu0 %v572
    %574 = vmatprep.subr.mxu0 0.0
    %v575 = vand.u32 %v72, 4294901760
    %v576 = vsub.f32 %v72, %v575
    %577 = vmatpush1.msra.mxu0 %v576
    %578 = vmatprep.subr.mxu0 0.0
    %v579 = vand.u32 %v73, 4294901760
    %v580 = vsub.f32 %v73, %v579
    %581 = vmatpush1.msra.mxu0 %v580
    %582 = vmatprep.subr.mxu0 0.0
    %v583 = vand.u32 %v74, 4294901760
    %v584 = vsub.f32 %v74, %v583
    %585 = vmatpush1.msra.mxu0 %v584
    %586 = vmatprep.subr.mxu0 0.0
    %v587 = vand.u32 %v75, 4294901760
    %v588 = vsub.f32 %v75, %v587
    %589 = vmatpush1.msra.mxu0 %v588
    %590 = vmatprep.subr.mxu0 0.0
    %v591 = vand.u32 %v76, 4294901760
    %v592 = vsub.f32 %v76, %v591
    %593 = vmatpush1.msra.mxu0 %v592
    %594 = vmatprep.subr.mxu0 0.0
    %v595 = vand.u32 %v77, 4294901760
    %v596 = vsub.f32 %v77, %v595
    %597 = vmatpush1.msra.mxu0 %v596
    %598 = vmatprep.subr.mxu0 0.0
    %v599 = vand.u32 %v78, 4294901760
    %v600 = vsub.f32 %v78, %v599
    %601 = vmatpush1.msra.mxu0 %v600
    %602 = vmatprep.subr.mxu0 0.0
    %v603 = vand.u32 %v79, 4294901760
    %v604 = vsub.f32 %v79, %v603
    %605 = vmatpush1.msra.mxu0 %v604
    %v606 = vand.u32 %v41, 4294901760
    %v607 = vsub.f32 %v41, %v606
    %608 = vmatprep.mubr.f32.mxu0 %v607
    %v609 = vand.u32 %v40, 4294901760
    %v610 = vsub.f32 %v40, %v609
    %611 = vmatmul.mubr.f32.gmra.mrb[0].mxu0 %v610
    %v612 = vpop.f32.mrb[0].mxu0
    %v613 = vadd.f32 %v468, %v612
    %v614 = vpop.f32.mrb[0].mxu0
    %v615 = vand.u32 %v45, 4294901760
    %v616 = vsub.f32 %v45, %v615
    %617 = vmatprep.mubr.f32.mxu0 %v616
    %v618 = vand.u32 %v44, 4294901760
    %v619 = vsub.f32 %v44, %v618
    %620 = vmatmul.mubr.f32.gmra.mrb[0].mxu0 %v619
    %v621 = vpop.f32.mrb[0].mxu0
    %v622 = vadd.f32 %v475, %v621
    %v623 = vpop.f32.mrb[0].mxu0
    %624 = vdwg.mxu0
    %625 = vmatprep.subr.mxu0 0.0
    %v626 = vand.u32 %v48, 4294901760
    %627 = vmatpush1.msra.mxu0 %v626
    %628 = vmatprep.subr.mxu0 0.0
    %v629 = vand.u32 %v49, 4294901760
    %630 = vmatpush1.msra.mxu0 %v629
    %631 = vmatprep.subr.mxu0 0.0
    %v632 = vand.u32 %v50, 4294901760
    %633 = vmatpush1.msra.mxu0 %v632
    %634 = vmatprep.subr.mxu0 0.0
    %v635 = vand.u32 %v51, 4294901760
    %636 = vmatpush1.msra.mxu0 %v635
    %637 = vmatprep.subr.mxu0 0.0
    %v638 = vand.u32 %v52, 4294901760
    %639 = vmatpush1.msra.mxu0 %v638
    %640 = vmatprep.subr.mxu0 0.0
    %v641 = vand.u32 %v53, 4294901760
    %642 = vmatpush1.msra.mxu0 %v641
    %643 = vmatprep.subr.mxu0 0.0
    %v644 = vand.u32 %v54, 4294901760
    %645 = vmatpush1.msra.mxu0 %v644
    %646 = vmatprep.subr.mxu0 0.0
    %v647 = vand.u32 %v55, 4294901760
    %648 = vmatpush1.msra.mxu0 %v647
    %649 = vmatprep.subr.mxu0 0.0
    %v650 = vand.u32 %v56, 4294901760
    %651 = vmatpush1.msra.mxu0 %v650
    %652 = vmatprep.subr.mxu0 0.0
    %v653 = vand.u32 %v57, 4294901760
    %654 = vmatpush1.msra.mxu0 %v653
    %655 = vmatprep.subr.mxu0 0.0
    %v656 = vand.u32 %v58, 4294901760
    %657 = vmatpush1.msra.mxu0 %v656
    %658 = vmatprep.subr.mxu0 0.0
    %v659 = vand.u32 %v59, 4294901760
    %660 = vmatpush1.msra.mxu0 %v659
    %661 = vmatprep.subr.mxu0 0.0
    %v662 = vand.u32 %v60, 4294901760
    %663 = vmatpush1.msra.mxu0 %v662
    %664 = vmatprep.subr.mxu0 0.0
    %v665 = vand.u32 %v61, 4294901760
    %666 = vmatpush1.msra.mxu0 %v665
    %667 = vmatprep.subr.mxu0 0.0
    %v668 = vand.u32 %v62, 4294901760
    %669 = vmatpush1.msra.mxu0 %v668
    %670 = vmatprep.subr.mxu0 0.0
    %v671 = vand.u32 %v63, 4294901760
    %672 = vmatpush1.msra.mxu0 %v671
    %673 = vmatprep.subr.mxu0 0.0
    %v674 = vand.u32 %v64, 4294901760
    %675 = vmatpush1.msra.mxu0 %v674
    %676 = vmatprep.subr.mxu0 0.0
    %v677 = vand.u32 %v65, 4294901760
    %678 = vmatpush1.msra.mxu0 %v677
    %679 = vmatprep.subr.mxu0 0.0
    %v680 = vand.u32 %v66, 4294901760
    %681 = vmatpush1.msra.mxu0 %v680
    %682 = vmatprep.subr.mxu0 0.0
    %v683 = vand.u32 %v67, 4294901760
    %684 = vmatpush1.msra.mxu0 %v683
    %685 = vmatprep.subr.mxu0 0.0
    %v686 = vand.u32 %v68, 4294901760
    %687 = vmatpush1.msra.mxu0 %v686
    %688 = vmatprep.subr.mxu0 0.0
    %v689 = vand.u32 %v69, 4294901760
    %690 = vmatpush1.msra.mxu0 %v689
    %691 = vmatprep.subr.mxu0 0.0
    %v692 = vand.u32 %v70, 4294901760
    %693 = vmatpush1.msra.mxu0 %v692
    %694 = vmatprep.subr.mxu0 0.0
    %v695 = vand.u32 %v71, 4294901760
    %696 = vmatpush1.msra.mxu0 %v695
    %697 = vmatprep.subr.mxu0 0.0
    %v698 = vand.u32 %v72, 4294901760
    %699 = vmatpush1.msra.mxu0 %v698
    %700 = vmatprep.subr.mxu0 0.0
    %v701 = vand.u32 %v73, 4294901760
    %702 = vmatpush1.msra.mxu0 %v701
    %703 = vmatprep.subr.mxu0 0.0
    %v704 = vand.u32 %v74, 4294901760
    %705 = vmatpush1.msra.mxu0 %v704
    %706 = vmatprep.subr.mxu0 0.0
    %v707 = vand.u32 %v75, 4294901760
    %708 = vmatpush1.msra.mxu0 %v707
    %709 = vmatprep.subr.mxu0 0.0
    %v710 = vand.u32 %v76, 4294901760
    %711 = vmatpush1.msra.mxu0 %v710
    %712 = vmatprep.subr.mxu0 0.0
    %v713 = vand.u32 %v77, 4294901760
    %714 = vmatpush1.msra.mxu0 %v713
    %715 = vmatprep.subr.mxu0 0.0
    %v716 = vand.u32 %v78, 4294901760
    %717 = vmatpush1.msra.mxu0 %v716
    %718 = vmatprep.subr.mxu0 0.0
    %v719 = vand.u32 %v79, 4294901760
    %720 = vmatpush1.msra.mxu0 %v719
    %v721 = vand.u32 %v41, 4294901760
    %v722 = vsub.f32 %v41, %v721
    %v723 = vand.u32 %v722, 4294901760
    %724 = vmatprep.mubr.f32.mxu0 %v723
    %v725 = vand.u32 %v40, 4294901760
    %v726 = vsub.f32 %v40, %v725
    %v727 = vand.u32 %v726, 4294901760
    %728 = vmatmul.mubr.f32.gmra.mrb[0].mxu0 %v727
    %v729 = vpop.f32.mrb[0].mxu0
    %v730 = vadd.f32 %v613, %v729
    %v731 = vpop.f32.mrb[0].mxu0
    %v732 = vand.u32 %v45, 4294901760
    %v733 = vsub.f32 %v45, %v732
    %v734 = vand.u32 %v733, 4294901760
    %735 = vmatprep.mubr.f32.mxu0 %v734
    %v736 = vand.u32 %v44, 4294901760
    %v737 = vsub.f32 %v44, %v736
    %v738 = vand.u32 %v737, 4294901760
    %739 = vmatmul.mubr.f32.gmra.mrb[0].mxu0 %v738
    %v740 = vpop.f32.mrb[0].mxu0
    %v741 = vadd.f32 %v622, %v740
    %v742 = vpop.f32.mrb[0].mxu0
    %743 = vdwg.mxu0
    %744 = vmatprep.subr.mxu0 0.0
    %v745 = vand.u32 %v48, 4294901760
    %v746 = vsub.f32 %v48, %v745
    %v747 = vand.u32 %v746, 4294901760
    %748 = vmatpush1.msra.mxu0 %v747
    %749 = vmatprep.subr.mxu0 0.0
    %v750 = vand.u32 %v49, 4294901760
    %v751 = vsub.f32 %v49, %v750
    %v752 = vand.u32 %v751, 4294901760
    %753 = vmatpush1.msra.mxu0 %v752
    %754 = vmatprep.subr.mxu0 0.0
    %v755 = vand.u32 %v50, 4294901760
    %v756 = vsub.f32 %v50, %v755
    %v757 = vand.u32 %v756, 4294901760
    %758 = vmatpush1.msra.mxu0 %v757
    %759 = vmatprep.subr.mxu0 0.0
    %v760 = vand.u32 %v51, 4294901760
    %v761 = vsub.f32 %v51, %v760
    %v762 = vand.u32 %v761, 4294901760
    %763 = vmatpush1.msra.mxu0 %v762
    %764 = vmatprep.subr.mxu0 0.0
    %v765 = vand.u32 %v52, 4294901760
    %v766 = vsub.f32 %v52, %v765
    %v767 = vand.u32 %v766, 4294901760
    %768 = vmatpush1.msra.mxu0 %v767
    %769 = vmatprep.subr.mxu0 0.0
    %v770 = vand.u32 %v53, 4294901760
    %v771 = vsub.f32 %v53, %v770
    %v772 = vand.u32 %v771, 4294901760
    %773 = vmatpush1.msra.mxu0 %v772
    %774 = vmatprep.subr.mxu0 0.0
    %v775 = vand.u32 %v54, 4294901760
    %v776 = vsub.f32 %v54, %v775
    %v777 = vand.u32 %v776, 4294901760
    %778 = vmatpush1.msra.mxu0 %v777
    %779 = vmatprep.subr.mxu0 0.0
    %v780 = vand.u32 %v55, 4294901760
    %v781 = vsub.f32 %v55, %v780
    %v782 = vand.u32 %v781, 4294901760
    %783 = vmatpush1.msra.mxu0 %v782
    %784 = vmatprep.subr.mxu0 0.0
    %v785 = vand.u32 %v56, 4294901760
    %v786 = vsub.f32 %v56, %v785
    %v787 = vand.u32 %v786, 4294901760
    %788 = vmatpush1.msra.mxu0 %v787
    %789 = vmatprep.subr.mxu0 0.0
    %v790 = vand.u32 %v57, 4294901760
    %v791 = vsub.f32 %v57, %v790
    %v792 = vand.u32 %v791, 4294901760
    %793 = vmatpush1.msra.mxu0 %v792
    %794 = vmatprep.subr.mxu0 0.0
    %v795 = vand.u32 %v58, 4294901760
    %v796 = vsub.f32 %v58, %v795
    %v797 = vand.u32 %v796, 4294901760
    %798 = vmatpush1.msra.mxu0 %v797
    %799 = vmatprep.subr.mxu0 0.0
    %v800 = vand.u32 %v59, 4294901760
    %v801 = vsub.f32 %v59, %v800
    %v802 = vand.u32 %v801, 4294901760
    %803 = vmatpush1.msra.mxu0 %v802
    %804 = vmatprep.subr.mxu0 0.0
    %v805 = vand.u32 %v60, 4294901760
    %v806 = vsub.f32 %v60, %v805
    %v807 = vand.u32 %v806, 4294901760
    %808 = vmatpush1.msra.mxu0 %v807
    %809 = vmatprep.subr.mxu0 0.0
    %v810 = vand.u32 %v61, 4294901760
    %v811 = vsub.f32 %v61, %v810
    %v812 = vand.u32 %v811, 4294901760
    %813 = vmatpush1.msra.mxu0 %v812
    %814 = vmatprep.subr.mxu0 0.0
    %v815 = vand.u32 %v62, 4294901760
    %v816 = vsub.f32 %v62, %v815
    %v817 = vand.u32 %v816, 4294901760
    %818 = vmatpush1.msra.mxu0 %v817
    %819 = vmatprep.subr.mxu0 0.0
    %v820 = vand.u32 %v63, 4294901760
    %v821 = vsub.f32 %v63, %v820
    %v822 = vand.u32 %v821, 4294901760
    %823 = vmatpush1.msra.mxu0 %v822
    %824 = vmatprep.subr.mxu0 0.0
    %v825 = vand.u32 %v64, 4294901760
    %v826 = vsub.f32 %v64, %v825
    %v827 = vand.u32 %v826, 4294901760
    %828 = vmatpush1.msra.mxu0 %v827
    %829 = vmatprep.subr.mxu0 0.0
    %v830 = vand.u32 %v65, 4294901760
    %v831 = vsub.f32 %v65, %v830
    %v832 = vand.u32 %v831, 4294901760
    %833 = vmatpush1.msra.mxu0 %v832
    %834 = vmatprep.subr.mxu0 0.0
    %v835 = vand.u32 %v66, 4294901760
    %v836 = vsub.f32 %v66, %v835
    %v837 = vand.u32 %v836, 4294901760
    %838 = vmatpush1.msra.mxu0 %v837
    %839 = vmatprep.subr.mxu0 0.0
    %v840 = vand.u32 %v67, 4294901760
    %v841 = vsub.f32 %v67, %v840
    %v842 = vand.u32 %v841, 4294901760
    %843 = vmatpush1.msra.mxu0 %v842
    %844 = vmatprep.subr.mxu0 0.0
    %v845 = vand.u32 %v68, 4294901760
    %v846 = vsub.f32 %v68, %v845
    %v847 = vand.u32 %v846, 4294901760
    %848 = vmatpush1.msra.mxu0 %v847
    %849 = vmatprep.subr.mxu0 0.0
    %v850 = vand.u32 %v69, 4294901760
    %v851 = vsub.f32 %v69, %v850
    %v852 = vand.u32 %v851, 4294901760
    %853 = vmatpush1.msra.mxu0 %v852
    %854 = vmatprep.subr.mxu0 0.0
    %v855 = vand.u32 %v70, 4294901760
    %v856 = vsub.f32 %v70, %v855
    %v857 = vand.u32 %v856, 4294901760
    %858 = vmatpush1.msra.mxu0 %v857
    %859 = vmatprep.subr.mxu0 0.0
    %v860 = vand.u32 %v71, 4294901760
    %v861 = vsub.f32 %v71, %v860
    %v862 = vand.u32 %v861, 4294901760
    %863 = vmatpush1.msra.mxu0 %v862
    %864 = vmatprep.subr.mxu0 0.0
    %v865 = vand.u32 %v72, 4294901760
    %v866 = vsub.f32 %v72, %v865
    %v867 = vand.u32 %v866, 4294901760
    %868 = vmatpush1.msra.mxu0 %v867
    %869 = vmatprep.subr.mxu0 0.0
    %v870 = vand.u32 %v73, 4294901760
    %v871 = vsub.f32 %v73, %v870
    %v872 = vand.u32 %v871, 4294901760
    %873 = vmatpush1.msra.mxu0 %v872
    %874 = vmatprep.subr.mxu0 0.0
    %v875 = vand.u32 %v74, 4294901760
    %v876 = vsub.f32 %v74, %v875
    %v877 = vand.u32 %v876, 4294901760
    %878 = vmatpush1.msra.mxu0 %v877
    %879 = vmatprep.subr.mxu0 0.0
    %v880 = vand.u32 %v75, 4294901760
    %v881 = vsub.f32 %v75, %v880
    %v882 = vand.u32 %v881, 4294901760
    %883 = vmatpush1.msra.mxu0 %v882
    %884 = vmatprep.subr.mxu0 0.0
    %v885 = vand.u32 %v76, 4294901760
    %v886 = vsub.f32 %v76, %v885
    %v887 = vand.u32 %v886, 4294901760
    %888 = vmatpush1.msra.mxu0 %v887
    %889 = vmatprep.subr.mxu0 0.0
    %v890 = vand.u32 %v77, 4294901760
    %v891 = vsub.f32 %v77, %v890
    %v892 = vand.u32 %v891, 4294901760
    %893 = vmatpush1.msra.mxu0 %v892
    %894 = vmatprep.subr.mxu0 0.0
    %v895 = vand.u32 %v78, 4294901760
    %v896 = vsub.f32 %v78, %v895
    %v897 = vand.u32 %v896, 4294901760
    %898 = vmatpush1.msra.mxu0 %v897
    %899 = vmatprep.subr.mxu0 0.0
    %v900 = vand.u32 %v79, 4294901760
    %v901 = vsub.f32 %v79, %v900
    %v902 = vand.u32 %v901, 4294901760
    %903 = vmatpush1.msra.mxu0 %v902
    %v904 = vand.u32 %v41, 4294901760
    %905 = vmatprep.mubr.f32.mxu0 %v904
    %v906 = vand.u32 %v40, 4294901760
    %907 = vmatmul.mubr.f32.gmra.mrb[0].mxu0 %v906
    %v908 = vpop.f32.mrb[0].mxu0
    %v909 = vadd.f32 %v730, %v908
    %v910 = vpop.f32.mrb[0].mxu0
    %v911 = vand.u32 %v45, 4294901760
    %912 = vmatprep.mubr.f32.mxu0 %v911
    %v913 = vand.u32 %v44, 4294901760
    %914 = vmatmul.mubr.f32.gmra.mrb[0].mxu0 %v913
    %v915 = vpop.f32.mrb[0].mxu0
    %v916 = vadd.f32 %v741, %v915
    %v917 = vpop.f32.mrb[0].mxu0
    %918 = vdwg.mxu0
    %919 = vmatprep.subr.mxu0 0.0
    %v920 = vand.u32 %v48, 4294901760
    %921 = vmatpush1.msra.mxu0 %v920
    %922 = vmatprep.subr.mxu0 0.0
    %v923 = vand.u32 %v49, 4294901760
    %924 = vmatpush1.msra.mxu0 %v923
    %925 = vmatprep.subr.mxu0 0.0
    %v926 = vand.u32 %v50, 4294901760
    %927 = vmatpush1.msra.mxu0 %v926
    %928 = vmatprep.subr.mxu0 0.0
    %v929 = vand.u32 %v51, 4294901760
    %930 = vmatpush1.msra.mxu0 %v929
    %931 = vmatprep.subr.mxu0 0.0
    %v932 = vand.u32 %v52, 4294901760
    %933 = vmatpush1.msra.mxu0 %v932
    %934 = vmatprep.subr.mxu0 0.0
    %v935 = vand.u32 %v53, 4294901760
    %936 = vmatpush1.msra.mxu0 %v935
    %937 = vmatprep.subr.mxu0 0.0
    %v938 = vand.u32 %v54, 4294901760
    %939 = vmatpush1.msra.mxu0 %v938
    %940 = vmatprep.subr.mxu0 0.0
    %v941 = vand.u32 %v55, 4294901760
    %942 = vmatpush1.msra.mxu0 %v941
    %943 = vmatprep.subr.mxu0 0.0
    %v944 = vand.u32 %v56, 4294901760
    %945 = vmatpush1.msra.mxu0 %v944
    %946 = vmatprep.subr.mxu0 0.0
    %v947 = vand.u32 %v57, 4294901760
    %948 = vmatpush1.msra.mxu0 %v947
    %949 = vmatprep.subr.mxu0 0.0
    %v950 = vand.u32 %v58, 4294901760
    %951 = vmatpush1.msra.mxu0 %v950
    %952 = vmatprep.subr.mxu0 0.0
    %v953 = vand.u32 %v59, 4294901760
    %954 = vmatpush1.msra.mxu0 %v953
    %955 = vmatprep.subr.mxu0 0.0
    %v956 = vand.u32 %v60, 4294901760
    %957 = vmatpush1.msra.mxu0 %v956
    %958 = vmatprep.subr.mxu0 0.0
    %v959 = vand.u32 %v61, 4294901760
    %960 = vmatpush1.msra.mxu0 %v959
    %961 = vmatprep.subr.mxu0 0.0
    %v962 = vand.u32 %v62, 4294901760
    %963 = vmatpush1.msra.mxu0 %v962
    %964 = vmatprep.subr.mxu0 0.0
    %v965 = vand.u32 %v63, 4294901760
    %966 = vmatpush1.msra.mxu0 %v965
    %967 = vmatprep.subr.mxu0 0.0
    %v968 = vand.u32 %v64, 4294901760
    %969 = vmatpush1.msra.mxu0 %v968
    %970 = vmatprep.subr.mxu0 0.0
    %v971 = vand.u32 %v65, 4294901760
    %972 = vmatpush1.msra.mxu0 %v971
    %973 = vmatprep.subr.mxu0 0.0
    %v974 = vand.u32 %v66, 4294901760
    %975 = vmatpush1.msra.mxu0 %v974
    %976 = vmatprep.subr.mxu0 0.0
    %v977 = vand.u32 %v67, 4294901760
    %978 = vmatpush1.msra.mxu0 %v977
    %979 = vmatprep.subr.mxu0 0.0
    %v980 = vand.u32 %v68, 4294901760
    %981 = vmatpush1.msra.mxu0 %v980
    %982 = vmatprep.subr.mxu0 0.0
    %v983 = vand.u32 %v69, 4294901760
    %984 = vmatpush1.msra.mxu0 %v983
    %985 = vmatprep.subr.mxu0 0.0
    %v986 = vand.u32 %v70, 4294901760
    %987 = vmatpush1.msra.mxu0 %v986
    %988 = vmatprep.subr.mxu0 0.0
    %v989 = vand.u32 %v71, 4294901760
    %990 = vmatpush1.msra.mxu0 %v989
    %991 = vmatprep.subr.mxu0 0.0
    %v992 = vand.u32 %v72, 4294901760
    %993 = vmatpush1.msra.mxu0 %v992
    %994 = vmatprep.subr.mxu0 0.0
    %v995 = vand.u32 %v73, 4294901760
    %996 = vmatpush1.msra.mxu0 %v995
    %997 = vmatprep.subr.mxu0 0.0
    %v998 = vand.u32 %v74, 4294901760
    %999 = vmatpush1.msra.mxu0 %v998
    %1000 = vmatprep.subr.mxu0 0.0
    %v1001 = vand.u32 %v75, 4294901760
    %1002 = vmatpush1.msra.mxu0 %v1001
    %1003 = vmatprep.subr.mxu0 0.0
    %v1004 = vand.u32 %v76, 4294901760
    %1005 = vmatpush1.msra.mxu0 %v1004
    %1006 = vmatprep.subr.mxu0 0.0
    %v1007 = vand.u32 %v77, 4294901760
    %1008 = vmatpush1.msra.mxu0 %v1007
    %1009 = vmatprep.subr.mxu0 0.0
    %v1010 = vand.u32 %v78, 4294901760
    %1011 = vmatpush1.msra.mxu0 %v1010
    %1012 = vmatprep.subr.mxu0 0.0
    %v1013 = vand.u32 %v79, 4294901760
    %1014 = vmatpush1.msra.mxu0 %v1013
    %v1015 = vand.u32 %v41, 4294901760
    %1016 = vmatprep.mubr.f32.mxu0 %v1015
    %v1017 = vand.u32 %v40, 4294901760
    %1018 = vmatmul.mubr.f32.gmra.mrb[0].mxu0 %v1017
    %v1019 = vpop.f32.mrb[0].mxu0
    %v1020 = vadd.f32 %v909, %v1019
    %v1021 = vpop.f32.mrb[0].mxu0
    %v1022 = vand.u32 %v45, 4294901760
    %1023 = vmatprep.mubr.f32.mxu0 %v1022
    %v1024 = vand.u32 %v44, 4294901760
    %1025 = vmatmul.mubr.f32.gmra.mrb[0].mxu0 %v1024
    %v1026 = vpop.f32.mrb[0].mxu0
    %v1027 = vadd.f32 %v916, %v1026
    %v1028 = vpop.f32.mrb[0].mxu0
    %1029 = vdwg.mxu0
    %1030 = vmatprep.subr.mxu0 0.0
    %v1031 = vand.u32 %v80, 4294901760
    %1032 = vmatpush1.msra.mxu0 %v1031
    %1033 = vmatprep.subr.mxu0 0.0
    %v1034 = vand.u32 %v81, 4294901760
    %1035 = vmatpush1.msra.mxu0 %v1034
    %1036 = vmatprep.subr.mxu0 0.0
    %v1037 = vand.u32 %v82, 4294901760
    %1038 = vmatpush1.msra.mxu0 %v1037
    %1039 = vmatprep.subr.mxu0 0.0
    %v1040 = vand.u32 %v83, 4294901760
    %1041 = vmatpush1.msra.mxu0 %v1040
    %1042 = vmatprep.subr.mxu0 0.0
    %v1043 = vand.u32 %v84, 4294901760
    %1044 = vmatpush1.msra.mxu0 %v1043
    %1045 = vmatprep.subr.mxu0 0.0
    %v1046 = vand.u32 %v85, 4294901760
    %1047 = vmatpush1.msra.mxu0 %v1046
    %1048 = vmatprep.subr.mxu0 0.0
    %v1049 = vand.u32 %v86, 4294901760
    %1050 = vmatpush1.msra.mxu0 %v1049
    %1051 = vmatprep.subr.mxu0 0.0
    %v1052 = vand.u32 %v87, 4294901760
    %1053 = vmatpush1.msra.mxu0 %v1052
    %1054 = vmatprep.subr.mxu0 0.0
    %v1055 = vand.u32 %v88, 4294901760
    %1056 = vmatpush1.msra.mxu0 %v1055
    %1057 = vmatprep.subr.mxu0 0.0
    %v1058 = vand.u32 %v89, 4294901760
    %1059 = vmatpush1.msra.mxu0 %v1058
    %1060 = vmatprep.subr.mxu0 0.0
    %v1061 = vand.u32 %v90, 4294901760
    %1062 = vmatpush1.msra.mxu0 %v1061
    %1063 = vmatprep.subr.mxu0 0.0
    %v1064 = vand.u32 %v91, 4294901760
    %1065 = vmatpush1.msra.mxu0 %v1064
    %1066 = vmatprep.subr.mxu0 0.0
    %v1067 = vand.u32 %v92, 4294901760
    %1068 = vmatpush1.msra.mxu0 %v1067
    %1069 = vmatprep.subr.mxu0 0.0
    %v1070 = vand.u32 %v93, 4294901760
    %1071 = vmatpush1.msra.mxu0 %v1070
    %1072 = vmatprep.subr.mxu0 0.0
    %v1073 = vand.u32 %v94, 4294901760
    %1074 = vmatpush1.msra.mxu0 %v1073
    %1075 = vmatprep.subr.mxu0 0.0
    %v1076 = vand.u32 %v95, 4294901760
    %1077 = vmatpush1.msra.mxu0 %v1076
    %1078 = vmatprep.subr.mxu0 0.0
    %v1079 = vand.u32 %v96, 4294901760
    %1080 = vmatpush1.msra.mxu0 %v1079
    %1081 = vmatprep.subr.mxu0 0.0
    %v1082 = vand.u32 %v97, 4294901760
    %1083 = vmatpush1.msra.mxu0 %v1082
    %1084 = vmatprep.subr.mxu0 0.0
    %v1085 = vand.u32 %v98, 4294901760
    %1086 = vmatpush1.msra.mxu0 %v1085
    %1087 = vmatprep.subr.mxu0 0.0
    %v1088 = vand.u32 %v99, 4294901760
    %1089 = vmatpush1.msra.mxu0 %v1088
    %1090 = vmatprep.subr.mxu0 0.0
    %v1091 = vand.u32 %v100, 4294901760
    %1092 = vmatpush1.msra.mxu0 %v1091
    %1093 = vmatprep.subr.mxu0 0.0
    %v1094 = vand.u32 %v101, 4294901760
    %1095 = vmatpush1.msra.mxu0 %v1094
    %1096 = vmatprep.subr.mxu0 0.0
    %v1097 = vand.u32 %v102, 4294901760
    %1098 = vmatpush1.msra.mxu0 %v1097
    %1099 = vmatprep.subr.mxu0 0.0
    %v1100 = vand.u32 %v103, 4294901760
    %1101 = vmatpush1.msra.mxu0 %v1100
    %1102 = vmatprep.subr.mxu0 0.0
    %v1103 = vand.u32 %v104, 4294901760
    %1104 = vmatpush1.msra.mxu0 %v1103
    %1105 = vmatprep.subr.mxu0 0.0
    %v1106 = vand.u32 %v105, 4294901760
    %1107 = vmatpush1.msra.mxu0 %v1106
    %1108 = vmatprep.subr.mxu0 0.0
    %v1109 = vand.u32 %v106, 4294901760
    %1110 = vmatpush1.msra.mxu0 %v1109
    %1111 = vmatprep.subr.mxu0 0.0
    %v1112 = vand.u32 %v107, 4294901760
    %1113 = vmatpush1.msra.mxu0 %v1112
    %1114 = vmatprep.subr.mxu0 0.0
    %v1115 = vand.u32 %v108, 4294901760
    %1116 = vmatpush1.msra.mxu0 %v1115
    %1117 = vmatprep.subr.mxu0 0.0
    %v1118 = vand.u32 %v109, 4294901760
    %1119 = vmatpush1.msra.mxu0 %v1118
    %1120 = vmatprep.subr.mxu0 0.0
    %v1121 = vand.u32 %v110, 4294901760
    %1122 = vmatpush1.msra.mxu0 %v1121
    %1123 = vmatprep.subr.mxu0 0.0
    %v1124 = vand.u32 %v111, 4294901760
    %1125 = vmatpush1.msra.mxu0 %v1124
    %v1126 = vand.u32 %v43, 4294901760
    %v1127 = vsub.f32 %v43, %v1126
    %v1128 = vand.u32 %v1127, 4294901760
    %v1129 = vsub.f32 %v1127, %v1128
    %v1130 = vand.u32 %v1129, 4294901760
    %1131 = vmatprep.mubr.f32.mxu0 %v1130
    %v1132 = vand.u32 %v42, 4294901760
    %v1133 = vsub.f32 %v42, %v1132
    %v1134 = vand.u32 %v1133, 4294901760
    %v1135 = vsub.f32 %v1133, %v1134
    %v1136 = vand.u32 %v1135, 4294901760
    %1137 = vmatmul.mubr.f32.gmra.mrb[0].mxu0 %v1136
    %v1138 = vpop.f32.mrb[0].mxu0
    %v1139 = vadd.f32 %v1020, %v1138
    %v1140 = vpop.f32.mrb[0].mxu0
    %v1141 = vand.u32 %v47, 4294901760
    %v1142 = vsub.f32 %v47, %v1141
    %v1143 = vand.u32 %v1142, 4294901760
    %v1144 = vsub.f32 %v1142, %v1143
    %v1145 = vand.u32 %v1144, 4294901760
    %1146 = vmatprep.mubr.f32.mxu0 %v1145
    %v1147 = vand.u32 %v46, 4294901760
    %v1148 = vsub.f32 %v46, %v1147
    %v1149 = vand.u32 %v1148, 4294901760
    %v1150 = vsub.f32 %v1148, %v1149
    %v1151 = vand.u32 %v1150, 4294901760
    %1152 = vmatmul.mubr.f32.gmra.mrb[0].mxu0 %v1151
    %v1153 = vpop.f32.mrb[0].mxu0
    %v1154 = vadd.f32 %v1027, %v1153
    %v1155 = vpop.f32.mrb[0].mxu0
    %1156 = vdwg.mxu0
    %1157 = vmatprep.subr.mxu0 0.0
    %v1158 = vand.u32 %v80, 4294901760
    %v1159 = vsub.f32 %v80, %v1158
    %v1160 = vand.u32 %v1159, 4294901760
    %v1161 = vsub.f32 %v1159, %v1160
    %v1162 = vand.u32 %v1161, 4294901760
    %1163 = vmatpush1.msra.mxu0 %v1162
    %1164 = vmatprep.subr.mxu0 0.0
    %v1165 = vand.u32 %v81, 4294901760
    %v1166 = vsub.f32 %v81, %v1165
    %v1167 = vand.u32 %v1166, 4294901760
    %v1168 = vsub.f32 %v1166, %v1167
    %v1169 = vand.u32 %v1168, 4294901760
    %1170 = vmatpush1.msra.mxu0 %v1169
    %1171 = vmatprep.subr.mxu0 0.0
    %v1172 = vand.u32 %v82, 4294901760
    %v1173 = vsub.f32 %v82, %v1172
    %v1174 = vand.u32 %v1173, 4294901760
    %v1175 = vsub.f32 %v1173, %v1174
    %v1176 = vand.u32 %v1175, 4294901760
    %1177 = vmatpush1.msra.mxu0 %v1176
    %1178 = vmatprep.subr.mxu0 0.0
    %v1179 = vand.u32 %v83, 4294901760
    %v1180 = vsub.f32 %v83, %v1179
    %v1181 = vand.u32 %v1180, 4294901760
    %v1182 = vsub.f32 %v1180, %v1181
    %v1183 = vand.u32 %v1182, 4294901760
    %1184 = vmatpush1.msra.mxu0 %v1183
    %1185 = vmatprep.subr.mxu0 0.0
    %v1186 = vand.u32 %v84, 4294901760
    %v1187 = vsub.f32 %v84, %v1186
    %v1188 = vand.u32 %v1187, 4294901760
    %v1189 = vsub.f32 %v1187, %v1188
    %v1190 = vand.u32 %v1189, 4294901760
    %1191 = vmatpush1.msra.mxu0 %v1190
    %1192 = vmatprep.subr.mxu0 0.0
    %v1193 = vand.u32 %v85, 4294901760
    %v1194 = vsub.f32 %v85, %v1193
    %v1195 = vand.u32 %v1194, 4294901760
    %v1196 = vsub.f32 %v1194, %v1195
    %v1197 = vand.u32 %v1196, 4294901760
    %1198 = vmatpush1.msra.mxu0 %v1197
    %1199 = vmatprep.subr.mxu0 0.0
    %v1200 = vand.u32 %v86, 4294901760
    %v1201 = vsub.f32 %v86, %v1200
    %v1202 = vand.u32 %v1201, 4294901760
    %v1203 = vsub.f32 %v1201, %v1202
    %v1204 = vand.u32 %v1203, 4294901760
    %1205 = vmatpush1.msra.mxu0 %v1204
    %1206 = vmatprep.subr.mxu0 0.0
    %v1207 = vand.u32 %v87, 4294901760
    %v1208 = vsub.f32 %v87, %v1207
    %v1209 = vand.u32 %v1208, 4294901760
    %v1210 = vsub.f32 %v1208, %v1209
    %v1211 = vand.u32 %v1210, 4294901760
    %1212 = vmatpush1.msra.mxu0 %v1211
    %1213 = vmatprep.subr.mxu0 0.0
    %v1214 = vand.u32 %v88, 4294901760
    %v1215 = vsub.f32 %v88, %v1214
    %v1216 = vand.u32 %v1215, 4294901760
    %v1217 = vsub.f32 %v1215, %v1216
    %v1218 = vand.u32 %v1217, 4294901760
    %1219 = vmatpush1.msra.mxu0 %v1218
    %1220 = vmatprep.subr.mxu0 0.0
    %v1221 = vand.u32 %v89, 4294901760
    %v1222 = vsub.f32 %v89, %v1221
    %v1223 = vand.u32 %v1222, 4294901760
    %v1224 = vsub.f32 %v1222, %v1223
    %v1225 = vand.u32 %v1224, 4294901760
    %1226 = vmatpush1.msra.mxu0 %v1225
    %1227 = vmatprep.subr.mxu0 0.0
    %v1228 = vand.u32 %v90, 4294901760
    %v1229 = vsub.f32 %v90, %v1228
    %v1230 = vand.u32 %v1229, 4294901760
    %v1231 = vsub.f32 %v1229, %v1230
    %v1232 = vand.u32 %v1231, 4294901760
    %1233 = vmatpush1.msra.mxu0 %v1232
    %1234 = vmatprep.subr.mxu0 0.0
    %v1235 = vand.u32 %v91, 4294901760
    %v1236 = vsub.f32 %v91, %v1235
    %v1237 = vand.u32 %v1236, 4294901760
    %v1238 = vsub.f32 %v1236, %v1237
    %v1239 = vand.u32 %v1238, 4294901760
    %1240 = vmatpush1.msra.mxu0 %v1239
    %1241 = vmatprep.subr.mxu0 0.0
    %v1242 = vand.u32 %v92, 4294901760
    %v1243 = vsub.f32 %v92, %v1242
    %v1244 = vand.u32 %v1243, 4294901760
    %v1245 = vsub.f32 %v1243, %v1244
    %v1246 = vand.u32 %v1245, 4294901760
    %1247 = vmatpush1.msra.mxu0 %v1246
    %1248 = vmatprep.subr.mxu0 0.0
    %v1249 = vand.u32 %v93, 4294901760
    %v1250 = vsub.f32 %v93, %v1249
    %v1251 = vand.u32 %v1250, 4294901760
    %v1252 = vsub.f32 %v1250, %v1251
    %v1253 = vand.u32 %v1252, 4294901760
    %1254 = vmatpush1.msra.mxu0 %v1253
    %1255 = vmatprep.subr.mxu0 0.0
    %v1256 = vand.u32 %v94, 4294901760
    %v1257 = vsub.f32 %v94, %v1256
    %v1258 = vand.u32 %v1257, 4294901760
    %v1259 = vsub.f32 %v1257, %v1258
    %v1260 = vand.u32 %v1259, 4294901760
    %1261 = vmatpush1.msra.mxu0 %v1260
    %1262 = vmatprep.subr.mxu0 0.0
    %v1263 = vand.u32 %v95, 4294901760
    %v1264 = vsub.f32 %v95, %v1263
    %v1265 = vand.u32 %v1264, 4294901760
    %v1266 = vsub.f32 %v1264, %v1265
    %v1267 = vand.u32 %v1266, 4294901760
    %1268 = vmatpush1.msra.mxu0 %v1267
    %1269 = vmatprep.subr.mxu0 0.0
    %v1270 = vand.u32 %v96, 4294901760
    %v1271 = vsub.f32 %v96, %v1270
    %v1272 = vand.u32 %v1271, 4294901760
    %v1273 = vsub.f32 %v1271, %v1272
    %v1274 = vand.u32 %v1273, 4294901760
    %1275 = vmatpush1.msra.mxu0 %v1274
    %1276 = vmatprep.subr.mxu0 0.0
    %v1277 = vand.u32 %v97, 4294901760
    %v1278 = vsub.f32 %v97, %v1277
    %v1279 = vand.u32 %v1278, 4294901760
    %v1280 = vsub.f32 %v1278, %v1279
    %v1281 = vand.u32 %v1280, 4294901760
    %1282 = vmatpush1.msra.mxu0 %v1281
    %1283 = vmatprep.subr.mxu0 0.0
    %v1284 = vand.u32 %v98, 4294901760
    %v1285 = vsub.f32 %v98, %v1284
    %v1286 = vand.u32 %v1285, 4294901760
    %v1287 = vsub.f32 %v1285, %v1286
    %v1288 = vand.u32 %v1287, 4294901760
    %1289 = vmatpush1.msra.mxu0 %v1288
    %1290 = vmatprep.subr.mxu0 0.0
    %v1291 = vand.u32 %v99, 4294901760
    %v1292 = vsub.f32 %v99, %v1291
    %v1293 = vand.u32 %v1292, 4294901760
    %v1294 = vsub.f32 %v1292, %v1293
    %v1295 = vand.u32 %v1294, 4294901760
    %1296 = vmatpush1.msra.mxu0 %v1295
    %1297 = vmatprep.subr.mxu0 0.0
    %v1298 = vand.u32 %v100, 4294901760
    %v1299 = vsub.f32 %v100, %v1298
    %v1300 = vand.u32 %v1299, 4294901760
    %v1301 = vsub.f32 %v1299, %v1300
    %v1302 = vand.u32 %v1301, 4294901760
    %1303 = vmatpush1.msra.mxu0 %v1302
    %1304 = vmatprep.subr.mxu0 0.0
    %v1305 = vand.u32 %v101, 4294901760
    %v1306 = vsub.f32 %v101, %v1305
    %v1307 = vand.u32 %v1306, 4294901760
    %v1308 = vsub.f32 %v1306, %v1307
    %v1309 = vand.u32 %v1308, 4294901760
    %1310 = vmatpush1.msra.mxu0 %v1309
    %1311 = vmatprep.subr.mxu0 0.0
    %v1312 = vand.u32 %v102, 4294901760
    %v1313 = vsub.f32 %v102, %v1312
    %v1314 = vand.u32 %v1313, 4294901760
    %v1315 = vsub.f32 %v1313, %v1314
    %v1316 = vand.u32 %v1315, 4294901760
    %1317 = vmatpush1.msra.mxu0 %v1316
    %1318 = vmatprep.subr.mxu0 0.0
    %v1319 = vand.u32 %v103, 4294901760
    %v1320 = vsub.f32 %v103, %v1319
    %v1321 = vand.u32 %v1320, 4294901760
    %v1322 = vsub.f32 %v1320, %v1321
    %v1323 = vand.u32 %v1322, 4294901760
    %1324 = vmatpush1.msra.mxu0 %v1323
    %1325 = vmatprep.subr.mxu0 0.0
    %v1326 = vand.u32 %v104, 4294901760
    %v1327 = vsub.f32 %v104, %v1326
    %v1328 = vand.u32 %v1327, 4294901760
    %v1329 = vsub.f32 %v1327, %v1328
    %v1330 = vand.u32 %v1329, 4294901760
    %1331 = vmatpush1.msra.mxu0 %v1330
    %1332 = vmatprep.subr.mxu0 0.0
    %v1333 = vand.u32 %v105, 4294901760
    %v1334 = vsub.f32 %v105, %v1333
    %v1335 = vand.u32 %v1334, 4294901760
    %v1336 = vsub.f32 %v1334, %v1335
    %v1337 = vand.u32 %v1336, 4294901760
    %1338 = vmatpush1.msra.mxu0 %v1337
    %1339 = vmatprep.subr.mxu0 0.0
    %v1340 = vand.u32 %v106, 4294901760
    %v1341 = vsub.f32 %v106, %v1340
    %v1342 = vand.u32 %v1341, 4294901760
    %v1343 = vsub.f32 %v1341, %v1342
    %v1344 = vand.u32 %v1343, 4294901760
    %1345 = vmatpush1.msra.mxu0 %v1344
    %1346 = vmatprep.subr.mxu0 0.0
    %v1347 = vand.u32 %v107, 4294901760
    %v1348 = vsub.f32 %v107, %v1347
    %v1349 = vand.u32 %v1348, 4294901760
    %v1350 = vsub.f32 %v1348, %v1349
    %v1351 = vand.u32 %v1350, 4294901760
    %1352 = vmatpush1.msra.mxu0 %v1351
    %1353 = vmatprep.subr.mxu0 0.0
    %v1354 = vand.u32 %v108, 4294901760
    %v1355 = vsub.f32 %v108, %v1354
    %v1356 = vand.u32 %v1355, 4294901760
    %v1357 = vsub.f32 %v1355, %v1356
    %v1358 = vand.u32 %v1357, 4294901760
    %1359 = vmatpush1.msra.mxu0 %v1358
    %1360 = vmatprep.subr.mxu0 0.0
    %v1361 = vand.u32 %v109, 4294901760
    %v1362 = vsub.f32 %v109, %v1361
    %v1363 = vand.u32 %v1362, 4294901760
    %v1364 = vsub.f32 %v1362, %v1363
    %v1365 = vand.u32 %v1364, 4294901760
    %1366 = vmatpush1.msra.mxu0 %v1365
    %1367 = vmatprep.subr.mxu0 0.0
    %v1368 = vand.u32 %v110, 4294901760
    %v1369 = vsub.f32 %v110, %v1368
    %v1370 = vand.u32 %v1369, 4294901760
    %v1371 = vsub.f32 %v1369, %v1370
    %v1372 = vand.u32 %v1371, 4294901760
    %1373 = vmatpush1.msra.mxu0 %v1372
    %1374 = vmatprep.subr.mxu0 0.0
    %v1375 = vand.u32 %v111, 4294901760
    %v1376 = vsub.f32 %v111, %v1375
    %v1377 = vand.u32 %v1376, 4294901760
    %v1378 = vsub.f32 %v1376, %v1377
    %v1379 = vand.u32 %v1378, 4294901760
    %1380 = vmatpush1.msra.mxu0 %v1379
    %v1381 = vand.u32 %v43, 4294901760
    %1382 = vmatprep.mubr.f32.mxu0 %v1381
    %v1383 = vand.u32 %v42, 4294901760
    %1384 = vmatmul.mubr.f32.gmra.mrb[0].mxu0 %v1383
    %v1385 = vpop.f32.mrb[0].mxu0
    %v1386 = vadd.f32 %v1139, %v1385
    %v1387 = vpop.f32.mrb[0].mxu0
    %v1388 = vand.u32 %v47, 4294901760
    %1389 = vmatprep.mubr.f32.mxu0 %v1388
    %v1390 = vand.u32 %v46, 4294901760
    %1391 = vmatmul.mubr.f32.gmra.mrb[0].mxu0 %v1390
    %v1392 = vpop.f32.mrb[0].mxu0
    %v1393 = vadd.f32 %v1154, %v1392
    %v1394 = vpop.f32.mrb[0].mxu0
    %1395 = vdwg.mxu0
    %1396 = vmatprep.subr.mxu0 0.0
    %v1397 = vand.u32 %v80, 4294901760
    %v1398 = vsub.f32 %v80, %v1397
    %1399 = vmatpush1.msra.mxu0 %v1398
    %1400 = vmatprep.subr.mxu0 0.0
    %v1401 = vand.u32 %v81, 4294901760
    %v1402 = vsub.f32 %v81, %v1401
    %1403 = vmatpush1.msra.mxu0 %v1402
    %1404 = vmatprep.subr.mxu0 0.0
    %v1405 = vand.u32 %v82, 4294901760
    %v1406 = vsub.f32 %v82, %v1405
    %1407 = vmatpush1.msra.mxu0 %v1406
    %1408 = vmatprep.subr.mxu0 0.0
    %v1409 = vand.u32 %v83, 4294901760
    %v1410 = vsub.f32 %v83, %v1409
    %1411 = vmatpush1.msra.mxu0 %v1410
    %1412 = vmatprep.subr.mxu0 0.0
    %v1413 = vand.u32 %v84, 4294901760
    %v1414 = vsub.f32 %v84, %v1413
    %1415 = vmatpush1.msra.mxu0 %v1414
    %1416 = vmatprep.subr.mxu0 0.0
    %v1417 = vand.u32 %v85, 4294901760
    %v1418 = vsub.f32 %v85, %v1417
    %1419 = vmatpush1.msra.mxu0 %v1418
    %1420 = vmatprep.subr.mxu0 0.0
    %v1421 = vand.u32 %v86, 4294901760
    %v1422 = vsub.f32 %v86, %v1421
    %1423 = vmatpush1.msra.mxu0 %v1422
    %1424 = vmatprep.subr.mxu0 0.0
    %v1425 = vand.u32 %v87, 4294901760
    %v1426 = vsub.f32 %v87, %v1425
    %1427 = vmatpush1.msra.mxu0 %v1426
    %1428 = vmatprep.subr.mxu0 0.0
    %v1429 = vand.u32 %v88, 4294901760
    %v1430 = vsub.f32 %v88, %v1429
    %1431 = vmatpush1.msra.mxu0 %v1430
    %1432 = vmatprep.subr.mxu0 0.0
    %v1433 = vand.u32 %v89, 4294901760
    %v1434 = vsub.f32 %v89, %v1433
    %1435 = vmatpush1.msra.mxu0 %v1434
    %1436 = vmatprep.subr.mxu0 0.0
    %v1437 = vand.u32 %v90, 4294901760
    %v1438 = vsub.f32 %v90, %v1437
    %1439 = vmatpush1.msra.mxu0 %v1438
    %1440 = vmatprep.subr.mxu0 0.0
    %v1441 = vand.u32 %v91, 4294901760
    %v1442 = vsub.f32 %v91, %v1441
    %1443 = vmatpush1.msra.mxu0 %v1442
    %1444 = vmatprep.subr.mxu0 0.0
    %v1445 = vand.u32 %v92, 4294901760
    %v1446 = vsub.f32 %v92, %v1445
    %1447 = vmatpush1.msra.mxu0 %v1446
    %1448 = vmatprep.subr.mxu0 0.0
    %v1449 = vand.u32 %v93, 4294901760
    %v1450 = vsub.f32 %v93, %v1449
    %1451 = vmatpush1.msra.mxu0 %v1450
    %1452 = vmatprep.subr.mxu0 0.0
    %v1453 = vand.u32 %v94, 4294901760
    %v1454 = vsub.f32 %v94, %v1453
    %1455 = vmatpush1.msra.mxu0 %v1454
    %1456 = vmatprep.subr.mxu0 0.0
    %v1457 = vand.u32 %v95, 4294901760
    %v1458 = vsub.f32 %v95, %v1457
    %1459 = vmatpush1.msra.mxu0 %v1458
    %1460 = vmatprep.subr.mxu0 0.0
    %v1461 = vand.u32 %v96, 4294901760
    %v1462 = vsub.f32 %v96, %v1461
    %1463 = vmatpush1.msra.mxu0 %v1462
    %1464 = vmatprep.subr.mxu0 0.0
    %v1465 = vand.u32 %v97, 4294901760
    %v1466 = vsub.f32 %v97, %v1465
    %1467 = vmatpush1.msra.mxu0 %v1466
    %1468 = vmatprep.subr.mxu0 0.0
    %v1469 = vand.u32 %v98, 4294901760
    %v1470 = vsub.f32 %v98, %v1469
    %1471 = vmatpush1.msra.mxu0 %v1470
    %1472 = vmatprep.subr.mxu0 0.0
    %v1473 = vand.u32 %v99, 4294901760
    %v1474 = vsub.f32 %v99, %v1473
    %1475 = vmatpush1.msra.mxu0 %v1474
    %1476 = vmatprep.subr.mxu0 0.0
    %v1477 = vand.u32 %v100, 4294901760
    %v1478 = vsub.f32 %v100, %v1477
    %1479 = vmatpush1.msra.mxu0 %v1478
    %1480 = vmatprep.subr.mxu0 0.0
    %v1481 = vand.u32 %v101, 4294901760
    %v1482 = vsub.f32 %v101, %v1481
    %1483 = vmatpush1.msra.mxu0 %v1482
    %1484 = vmatprep.subr.mxu0 0.0
    %v1485 = vand.u32 %v102, 4294901760
    %v1486 = vsub.f32 %v102, %v1485
    %1487 = vmatpush1.msra.mxu0 %v1486
    %1488 = vmatprep.subr.mxu0 0.0
    %v1489 = vand.u32 %v103, 4294901760
    %v1490 = vsub.f32 %v103, %v1489
    %1491 = vmatpush1.msra.mxu0 %v1490
    %1492 = vmatprep.subr.mxu0 0.0
    %v1493 = vand.u32 %v104, 4294901760
    %v1494 = vsub.f32 %v104, %v1493
    %1495 = vmatpush1.msra.mxu0 %v1494
    %1496 = vmatprep.subr.mxu0 0.0
    %v1497 = vand.u32 %v105, 4294901760
    %v1498 = vsub.f32 %v105, %v1497
    %1499 = vmatpush1.msra.mxu0 %v1498
    %1500 = vmatprep.subr.mxu0 0.0
    %v1501 = vand.u32 %v106, 4294901760
    %v1502 = vsub.f32 %v106, %v1501
    %1503 = vmatpush1.msra.mxu0 %v1502
    %1504 = vmatprep.subr.mxu0 0.0
    %v1505 = vand.u32 %v107, 4294901760
    %v1506 = vsub.f32 %v107, %v1505
    %1507 = vmatpush1.msra.mxu0 %v1506
    %1508 = vmatprep.subr.mxu0 0.0
    %v1509 = vand.u32 %v108, 4294901760
    %v1510 = vsub.f32 %v108, %v1509
    %1511 = vmatpush1.msra.mxu0 %v1510
    %1512 = vmatprep.subr.mxu0 0.0
    %v1513 = vand.u32 %v109, 4294901760
    %v1514 = vsub.f32 %v109, %v1513
    %1515 = vmatpush1.msra.mxu0 %v1514
    %1516 = vmatprep.subr.mxu0 0.0
    %v1517 = vand.u32 %v110, 4294901760
    %v1518 = vsub.f32 %v110, %v1517
    %1519 = vmatpush1.msra.mxu0 %v1518
    %1520 = vmatprep.subr.mxu0 0.0
    %v1521 = vand.u32 %v111, 4294901760
    %v1522 = vsub.f32 %v111, %v1521
    %1523 = vmatpush1.msra.mxu0 %v1522
    %v1524 = vand.u32 %v43, 4294901760
    %v1525 = vsub.f32 %v43, %v1524
    %1526 = vmatprep.mubr.f32.mxu0 %v1525
    %v1527 = vand.u32 %v42, 4294901760
    %v1528 = vsub.f32 %v42, %v1527
    %1529 = vmatmul.mubr.f32.gmra.mrb[0].mxu0 %v1528
    %v1530 = vpop.f32.mrb[0].mxu0
    %v1531 = vadd.f32 %v1386, %v1530
    %v1532 = vpop.f32.mrb[0].mxu0
    %v1533 = vand.u32 %v47, 4294901760
    %v1534 = vsub.f32 %v47, %v1533
    %1535 = vmatprep.mubr.f32.mxu0 %v1534
    %v1536 = vand.u32 %v46, 4294901760
    %v1537 = vsub.f32 %v46, %v1536
    %1538 = vmatmul.mubr.f32.gmra.mrb[0].mxu0 %v1537
    %v1539 = vpop.f32.mrb[0].mxu0
    %v1540 = vadd.f32 %v1393, %v1539
    %v1541 = vpop.f32.mrb[0].mxu0
    %1542 = vdwg.mxu0
    %1543 = vmatprep.subr.mxu0 0.0
    %v1544 = vand.u32 %v80, 4294901760
    %1545 = vmatpush1.msra.mxu0 %v1544
    %1546 = vmatprep.subr.mxu0 0.0
    %v1547 = vand.u32 %v81, 4294901760
    %1548 = vmatpush1.msra.mxu0 %v1547
    %1549 = vmatprep.subr.mxu0 0.0
    %v1550 = vand.u32 %v82, 4294901760
    %1551 = vmatpush1.msra.mxu0 %v1550
    %1552 = vmatprep.subr.mxu0 0.0
    %v1553 = vand.u32 %v83, 4294901760
    %1554 = vmatpush1.msra.mxu0 %v1553
    %1555 = vmatprep.subr.mxu0 0.0
    %v1556 = vand.u32 %v84, 4294901760
    %1557 = vmatpush1.msra.mxu0 %v1556
    %1558 = vmatprep.subr.mxu0 0.0
    %v1559 = vand.u32 %v85, 4294901760
    %1560 = vmatpush1.msra.mxu0 %v1559
    %1561 = vmatprep.subr.mxu0 0.0
    %v1562 = vand.u32 %v86, 4294901760
    %1563 = vmatpush1.msra.mxu0 %v1562
    %1564 = vmatprep.subr.mxu0 0.0
    %v1565 = vand.u32 %v87, 4294901760
    %1566 = vmatpush1.msra.mxu0 %v1565
    %1567 = vmatprep.subr.mxu0 0.0
    %v1568 = vand.u32 %v88, 4294901760
    %1569 = vmatpush1.msra.mxu0 %v1568
    %1570 = vmatprep.subr.mxu0 0.0
    %v1571 = vand.u32 %v89, 4294901760
    %1572 = vmatpush1.msra.mxu0 %v1571
    %1573 = vmatprep.subr.mxu0 0.0
    %v1574 = vand.u32 %v90, 4294901760
    %1575 = vmatpush1.msra.mxu0 %v1574
    %1576 = vmatprep.subr.mxu0 0.0
    %v1577 = vand.u32 %v91, 4294901760
    %1578 = vmatpush1.msra.mxu0 %v1577
    %1579 = vmatprep.subr.mxu0 0.0
    %v1580 = vand.u32 %v92, 4294901760
    %1581 = vmatpush1.msra.mxu0 %v1580
    %1582 = vmatprep.subr.mxu0 0.0
    %v1583 = vand.u32 %v93, 4294901760
    %1584 = vmatpush1.msra.mxu0 %v1583
    %1585 = vmatprep.subr.mxu0 0.0
    %v1586 = vand.u32 %v94, 4294901760
    %1587 = vmatpush1.msra.mxu0 %v1586
    %1588 = vmatprep.subr.mxu0 0.0
    %v1589 = vand.u32 %v95, 4294901760
    %1590 = vmatpush1.msra.mxu0 %v1589
    %1591 = vmatprep.subr.mxu0 0.0
    %v1592 = vand.u32 %v96, 4294901760
    %1593 = vmatpush1.msra.mxu0 %v1592
    %1594 = vmatprep.subr.mxu0 0.0
    %v1595 = vand.u32 %v97, 4294901760
    %1596 = vmatpush1.msra.mxu0 %v1595
    %1597 = vmatprep.subr.mxu0 0.0
    %v1598 = vand.u32 %v98, 4294901760
    %1599 = vmatpush1.msra.mxu0 %v1598
    %1600 = vmatprep.subr.mxu0 0.0
    %v1601 = vand.u32 %v99, 4294901760
    %1602 = vmatpush1.msra.mxu0 %v1601
    %1603 = vmatprep.subr.mxu0 0.0
    %v1604 = vand.u32 %v100, 4294901760
    %1605 = vmatpush1.msra.mxu0 %v1604
    %1606 = vmatprep.subr.mxu0 0.0
    %v1607 = vand.u32 %v101, 4294901760
    %1608 = vmatpush1.msra.mxu0 %v1607
    %1609 = vmatprep.subr.mxu0 0.0
    %v1610 = vand.u32 %v102, 4294901760
    %1611 = vmatpush1.msra.mxu0 %v1610
    %1612 = vmatprep.subr.mxu0 0.0
    %v1613 = vand.u32 %v103, 4294901760
    %1614 = vmatpush1.msra.mxu0 %v1613
    %1615 = vmatprep.subr.mxu0 0.0
    %v1616 = vand.u32 %v104, 4294901760
    %1617 = vmatpush1.msra.mxu0 %v1616
    %1618 = vmatprep.subr.mxu0 0.0
    %v1619 = vand.u32 %v105, 4294901760
    %1620 = vmatpush1.msra.mxu0 %v1619
    %1621 = vmatprep.subr.mxu0 0.0
    %v1622 = vand.u32 %v106, 4294901760
    %1623 = vmatpush1.msra.mxu0 %v1622
    %1624 = vmatprep.subr.mxu0 0.0
    %v1625 = vand.u32 %v107, 4294901760
    %1626 = vmatpush1.msra.mxu0 %v1625
    %1627 = vmatprep.subr.mxu0 0.0
    %v1628 = vand.u32 %v108, 4294901760
    %1629 = vmatpush1.msra.mxu0 %v1628
    %1630 = vmatprep.subr.mxu0 0.0
    %v1631 = vand.u32 %v109, 4294901760
    %1632 = vmatpush1.msra.mxu0 %v1631
    %1633 = vmatprep.subr.mxu0 0.0
    %v1634 = vand.u32 %v110, 4294901760
    %1635 = vmatpush1.msra.mxu0 %v1634
    %1636 = vmatprep.subr.mxu0 0.0
    %v1637 = vand.u32 %v111, 4294901760
    %1638 = vmatpush1.msra.mxu0 %v1637
    %v1639 = vand.u32 %v43, 4294901760
    %v1640 = vsub.f32 %v43, %v1639
    %v1641 = vand.u32 %v1640, 4294901760
    %1642 = vmatprep.mubr.f32.mxu0 %v1641
    %v1643 = vand.u32 %v42, 4294901760
    %v1644 = vsub.f32 %v42, %v1643
    %v1645 = vand.u32 %v1644, 4294901760
    %1646 = vmatmul.mubr.f32.gmra.mrb[0].mxu0 %v1645
    %v1647 = vpop.f32.mrb[0].mxu0
    %v1648 = vadd.f32 %v1531, %v1647
    %v1649 = vpop.f32.mrb[0].mxu0
    %v1650 = vand.u32 %v47, 4294901760
    %v1651 = vsub.f32 %v47, %v1650
    %v1652 = vand.u32 %v1651, 4294901760
    %1653 = vmatprep.mubr.f32.mxu0 %v1652
    %v1654 = vand.u32 %v46, 4294901760
    %v1655 = vsub.f32 %v46, %v1654
    %v1656 = vand.u32 %v1655, 4294901760
    %1657 = vmatmul.mubr.f32.gmra.mrb[0].mxu0 %v1656
    %v1658 = vpop.f32.mrb[0].mxu0
    %v1659 = vadd.f32 %v1540, %v1658
    %v1660 = vpop.f32.mrb[0].mxu0
    %1661 = vdwg.mxu0
    %1662 = vmatprep.subr.mxu0 0.0
    %v1663 = vand.u32 %v80, 4294901760
    %v1664 = vsub.f32 %v80, %v1663
    %v1665 = vand.u32 %v1664, 4294901760
    %1666 = vmatpush1.msra.mxu0 %v1665
    %1667 = vmatprep.subr.mxu0 0.0
    %v1668 = vand.u32 %v81, 4294901760
    %v1669 = vsub.f32 %v81, %v1668
    %v1670 = vand.u32 %v1669, 4294901760
    %1671 = vmatpush1.msra.mxu0 %v1670
    %1672 = vmatprep.subr.mxu0 0.0
    %v1673 = vand.u32 %v82, 4294901760
    %v1674 = vsub.f32 %v82, %v1673
    %v1675 = vand.u32 %v1674, 4294901760
    %1676 = vmatpush1.msra.mxu0 %v1675
    %1677 = vmatprep.subr.mxu0 0.0
    %v1678 = vand.u32 %v83, 4294901760
    %v1679 = vsub.f32 %v83, %v1678
    %v1680 = vand.u32 %v1679, 4294901760
    %1681 = vmatpush1.msra.mxu0 %v1680
    %1682 = vmatprep.subr.mxu0 0.0
    %v1683 = vand.u32 %v84, 4294901760
    %v1684 = vsub.f32 %v84, %v1683
    %v1685 = vand.u32 %v1684, 4294901760
    %1686 = vmatpush1.msra.mxu0 %v1685
    %1687 = vmatprep.subr.mxu0 0.0
    %v1688 = vand.u32 %v85, 4294901760
    %v1689 = vsub.f32 %v85, %v1688
    %v1690 = vand.u32 %v1689, 4294901760
    %1691 = vmatpush1.msra.mxu0 %v1690
    %1692 = vmatprep.subr.mxu0 0.0
    %v1693 = vand.u32 %v86, 4294901760
    %v1694 = vsub.f32 %v86, %v1693
    %v1695 = vand.u32 %v1694, 4294901760
    %1696 = vmatpush1.msra.mxu0 %v1695
    %1697 = vmatprep.subr.mxu0 0.0
    %v1698 = vand.u32 %v87, 4294901760
    %v1699 = vsub.f32 %v87, %v1698
    %v1700 = vand.u32 %v1699, 4294901760
    %1701 = vmatpush1.msra.mxu0 %v1700
    %1702 = vmatprep.subr.mxu0 0.0
    %v1703 = vand.u32 %v88, 4294901760
    %v1704 = vsub.f32 %v88, %v1703
    %v1705 = vand.u32 %v1704, 4294901760
    %1706 = vmatpush1.msra.mxu0 %v1705
    %1707 = vmatprep.subr.mxu0 0.0
    %v1708 = vand.u32 %v89, 4294901760
    %v1709 = vsub.f32 %v89, %v1708
    %v1710 = vand.u32 %v1709, 4294901760
    %1711 = vmatpush1.msra.mxu0 %v1710
    %1712 = vmatprep.subr.mxu0 0.0
    %v1713 = vand.u32 %v90, 4294901760
    %v1714 = vsub.f32 %v90, %v1713
    %v1715 = vand.u32 %v1714, 4294901760
    %1716 = vmatpush1.msra.mxu0 %v1715
    %1717 = vmatprep.subr.mxu0 0.0
    %v1718 = vand.u32 %v91, 4294901760
    %v1719 = vsub.f32 %v91, %v1718
    %v1720 = vand.u32 %v1719, 4294901760
    %1721 = vmatpush1.msra.mxu0 %v1720
    %1722 = vmatprep.subr.mxu0 0.0
    %v1723 = vand.u32 %v92, 4294901760
    %v1724 = vsub.f32 %v92, %v1723
    %v1725 = vand.u32 %v1724, 4294901760
    %1726 = vmatpush1.msra.mxu0 %v1725
    %1727 = vmatprep.subr.mxu0 0.0
    %v1728 = vand.u32 %v93, 4294901760
    %v1729 = vsub.f32 %v93, %v1728
    %v1730 = vand.u32 %v1729, 4294901760
    %1731 = vmatpush1.msra.mxu0 %v1730
    %1732 = vmatprep.subr.mxu0 0.0
    %v1733 = vand.u32 %v94, 4294901760
    %v1734 = vsub.f32 %v94, %v1733
    %v1735 = vand.u32 %v1734, 4294901760
    %1736 = vmatpush1.msra.mxu0 %v1735
    %1737 = vmatprep.subr.mxu0 0.0
    %v1738 = vand.u32 %v95, 4294901760
    %v1739 = vsub.f32 %v95, %v1738
    %v1740 = vand.u32 %v1739, 4294901760
    %1741 = vmatpush1.msra.mxu0 %v1740
    %1742 = vmatprep.subr.mxu0 0.0
    %v1743 = vand.u32 %v96, 4294901760
    %v1744 = vsub.f32 %v96, %v1743
    %v1745 = vand.u32 %v1744, 4294901760
    %1746 = vmatpush1.msra.mxu0 %v1745
    %1747 = vmatprep.subr.mxu0 0.0
    %v1748 = vand.u32 %v97, 4294901760
    %v1749 = vsub.f32 %v97, %v1748
    %v1750 = vand.u32 %v1749, 4294901760
    %1751 = vmatpush1.msra.mxu0 %v1750
    %1752 = vmatprep.subr.mxu0 0.0
    %v1753 = vand.u32 %v98, 4294901760
    %v1754 = vsub.f32 %v98, %v1753
    %v1755 = vand.u32 %v1754, 4294901760
    %1756 = vmatpush1.msra.mxu0 %v1755
    %1757 = vmatprep.subr.mxu0 0.0
    %v1758 = vand.u32 %v99, 4294901760
    %v1759 = vsub.f32 %v99, %v1758
    %v1760 = vand.u32 %v1759, 4294901760
    %1761 = vmatpush1.msra.mxu0 %v1760
    %1762 = vmatprep.subr.mxu0 0.0
    %v1763 = vand.u32 %v100, 4294901760
    %v1764 = vsub.f32 %v100, %v1763
    %v1765 = vand.u32 %v1764, 4294901760
    %1766 = vmatpush1.msra.mxu0 %v1765
    %1767 = vmatprep.subr.mxu0 0.0
    %v1768 = vand.u32 %v101, 4294901760
    %v1769 = vsub.f32 %v101, %v1768
    %v1770 = vand.u32 %v1769, 4294901760
    %1771 = vmatpush1.msra.mxu0 %v1770
    %1772 = vmatprep.subr.mxu0 0.0
    %v1773 = vand.u32 %v102, 4294901760
    %v1774 = vsub.f32 %v102, %v1773
    %v1775 = vand.u32 %v1774, 4294901760
    %1776 = vmatpush1.msra.mxu0 %v1775
    %1777 = vmatprep.subr.mxu0 0.0
    %v1778 = vand.u32 %v103, 4294901760
    %v1779 = vsub.f32 %v103, %v1778
    %v1780 = vand.u32 %v1779, 4294901760
    %1781 = vmatpush1.msra.mxu0 %v1780
    %1782 = vmatprep.subr.mxu0 0.0
    %v1783 = vand.u32 %v104, 4294901760
    %v1784 = vsub.f32 %v104, %v1783
    %v1785 = vand.u32 %v1784, 4294901760
    %1786 = vmatpush1.msra.mxu0 %v1785
    %1787 = vmatprep.subr.mxu0 0.0
    %v1788 = vand.u32 %v105, 4294901760
    %v1789 = vsub.f32 %v105, %v1788
    %v1790 = vand.u32 %v1789, 4294901760
    %1791 = vmatpush1.msra.mxu0 %v1790
    %1792 = vmatprep.subr.mxu0 0.0
    %v1793 = vand.u32 %v106, 4294901760
    %v1794 = vsub.f32 %v106, %v1793
    %v1795 = vand.u32 %v1794, 4294901760
    %1796 = vmatpush1.msra.mxu0 %v1795
    %1797 = vmatprep.subr.mxu0 0.0
    %v1798 = vand.u32 %v107, 4294901760
    %v1799 = vsub.f32 %v107, %v1798
    %v1800 = vand.u32 %v1799, 4294901760
    %1801 = vmatpush1.msra.mxu0 %v1800
    %1802 = vmatprep.subr.mxu0 0.0
    %v1803 = vand.u32 %v108, 4294901760
    %v1804 = vsub.f32 %v108, %v1803
    %v1805 = vand.u32 %v1804, 4294901760
    %1806 = vmatpush1.msra.mxu0 %v1805
    %1807 = vmatprep.subr.mxu0 0.0
    %v1808 = vand.u32 %v109, 4294901760
    %v1809 = vsub.f32 %v109, %v1808
    %v1810 = vand.u32 %v1809, 4294901760
    %1811 = vmatpush1.msra.mxu0 %v1810
    %1812 = vmatprep.subr.mxu0 0.0
    %v1813 = vand.u32 %v110, 4294901760
    %v1814 = vsub.f32 %v110, %v1813
    %v1815 = vand.u32 %v1814, 4294901760
    %1816 = vmatpush1.msra.mxu0 %v1815
    %1817 = vmatprep.subr.mxu0 0.0
    %v1818 = vand.u32 %v111, 4294901760
    %v1819 = vsub.f32 %v111, %v1818
    %v1820 = vand.u32 %v1819, 4294901760
    %1821 = vmatpush1.msra.mxu0 %v1820
    %v1822 = vand.u32 %v43, 4294901760
    %1823 = vmatprep.mubr.f32.mxu0 %v1822
    %v1824 = vand.u32 %v42, 4294901760
    %1825 = vmatmul.mubr.f32.gmra.mrb[0].mxu0 %v1824
    %v1826 = vpop.f32.mrb[0].mxu0
    %v1827 = vadd.f32 %v1648, %v1826
    %v1828 = vpop.f32.mrb[0].mxu0
    %v1829 = vand.u32 %v47, 4294901760
    %1830 = vmatprep.mubr.f32.mxu0 %v1829
    %v1831 = vand.u32 %v46, 4294901760
    %1832 = vmatmul.mubr.f32.gmra.mrb[0].mxu0 %v1831
    %v1833 = vpop.f32.mrb[0].mxu0
    %v1834 = vadd.f32 %v1659, %v1833
    %v1835 = vpop.f32.mrb[0].mxu0
    %1836 = vdwg.mxu0
    %1837 = vmatprep.subr.mxu0 0.0
    %v1838 = vand.u32 %v80, 4294901760
    %1839 = vmatpush1.msra.mxu0 %v1838
    %1840 = vmatprep.subr.mxu0 0.0
    %v1841 = vand.u32 %v81, 4294901760
    %1842 = vmatpush1.msra.mxu0 %v1841
    %1843 = vmatprep.subr.mxu0 0.0
    %v1844 = vand.u32 %v82, 4294901760
    %1845 = vmatpush1.msra.mxu0 %v1844
    %1846 = vmatprep.subr.mxu0 0.0
    %v1847 = vand.u32 %v83, 4294901760
    %1848 = vmatpush1.msra.mxu0 %v1847
    %1849 = vmatprep.subr.mxu0 0.0
    %v1850 = vand.u32 %v84, 4294901760
    %1851 = vmatpush1.msra.mxu0 %v1850
    %1852 = vmatprep.subr.mxu0 0.0
    %v1853 = vand.u32 %v85, 4294901760
    %1854 = vmatpush1.msra.mxu0 %v1853
    %1855 = vmatprep.subr.mxu0 0.0
    %v1856 = vand.u32 %v86, 4294901760
    %1857 = vmatpush1.msra.mxu0 %v1856
    %1858 = vmatprep.subr.mxu0 0.0
    %v1859 = vand.u32 %v87, 4294901760
    %1860 = vmatpush1.msra.mxu0 %v1859
    %1861 = vmatprep.subr.mxu0 0.0
    %v1862 = vand.u32 %v88, 4294901760
    %1863 = vmatpush1.msra.mxu0 %v1862
    %1864 = vmatprep.subr.mxu0 0.0
    %v1865 = vand.u32 %v89, 4294901760
    %1866 = vmatpush1.msra.mxu0 %v1865
    %1867 = vmatprep.subr.mxu0 0.0
    %v1868 = vand.u32 %v90, 4294901760
    %1869 = vmatpush1.msra.mxu0 %v1868
    %1870 = vmatprep.subr.mxu0 0.0
    %v1871 = vand.u32 %v91, 4294901760
    %1872 = vmatpush1.msra.mxu0 %v1871
    %1873 = vmatprep.subr.mxu0 0.0
    %v1874 = vand.u32 %v92, 4294901760
    %1875 = vmatpush1.msra.mxu0 %v1874
    %1876 = vmatprep.subr.mxu0 0.0
    %v1877 = vand.u32 %v93, 4294901760
    %1878 = vmatpush1.msra.mxu0 %v1877
    %1879 = vmatprep.subr.mxu0 0.0
    %v1880 = vand.u32 %v94, 4294901760
    %1881 = vmatpush1.msra.mxu0 %v1880
    %1882 = vmatprep.subr.mxu0 0.0
    %v1883 = vand.u32 %v95, 4294901760
    %1884 = vmatpush1.msra.mxu0 %v1883
    %1885 = vmatprep.subr.mxu0 0.0
    %v1886 = vand.u32 %v96, 4294901760
    %1887 = vmatpush1.msra.mxu0 %v1886
    %1888 = vmatprep.subr.mxu0 0.0
    %v1889 = vand.u32 %v97, 4294901760
    %1890 = vmatpush1.msra.mxu0 %v1889
    %1891 = vmatprep.subr.mxu0 0.0
    %v1892 = vand.u32 %v98, 4294901760
    %1893 = vmatpush1.msra.mxu0 %v1892
    %1894 = vmatprep.subr.mxu0 0.0
    %v1895 = vand.u32 %v99, 4294901760
    %1896 = vmatpush1.msra.mxu0 %v1895
    %1897 = vmatprep.subr.mxu0 0.0
    %v1898 = vand.u32 %v100, 4294901760
    %1899 = vmatpush1.msra.mxu0 %v1898
    %1900 = vmatprep.subr.mxu0 0.0
    %v1901 = vand.u32 %v101, 4294901760
    %1902 = vmatpush1.msra.mxu0 %v1901
    %1903 = vmatprep.subr.mxu0 0.0
    %v1904 = vand.u32 %v102, 4294901760
    %1905 = vmatpush1.msra.mxu0 %v1904
    %1906 = vmatprep.subr.mxu0 0.0
    %v1907 = vand.u32 %v103, 4294901760
    %1908 = vmatpush1.msra.mxu0 %v1907
    %1909 = vmatprep.subr.mxu0 0.0
    %v1910 = vand.u32 %v104, 4294901760
    %1911 = vmatpush1.msra.mxu0 %v1910
    %1912 = vmatprep.subr.mxu0 0.0
    %v1913 = vand.u32 %v105, 4294901760
    %1914 = vmatpush1.msra.mxu0 %v1913
    %1915 = vmatprep.subr.mxu0 0.0
    %v1916 = vand.u32 %v106, 4294901760
    %1917 = vmatpush1.msra.mxu0 %v1916
    %1918 = vmatprep.subr.mxu0 0.0
    %v1919 = vand.u32 %v107, 4294901760
    %1920 = vmatpush1.msra.mxu0 %v1919
    %1921 = vmatprep.subr.mxu0 0.0
    %v1922 = vand.u32 %v108, 4294901760
    %1923 = vmatpush1.msra.mxu0 %v1922
    %1924 = vmatprep.subr.mxu0 0.0
    %v1925 = vand.u32 %v109, 4294901760
    %1926 = vmatpush1.msra.mxu0 %v1925
    %1927 = vmatprep.subr.mxu0 0.0
    %v1928 = vand.u32 %v110, 4294901760
    %1929 = vmatpush1.msra.mxu0 %v1928
    %1930 = vmatprep.subr.mxu0 0.0
    %v1931 = vand.u32 %v111, 4294901760
    %1932 = vmatpush1.msra.mxu0 %v1931
    %v1933 = vand.u32 %v43, 4294901760
    %1934 = vmatprep.mubr.f32.mxu0 %v1933
    %v1935 = vand.u32 %v42, 4294901760
    %1936 = vmatmul.mubr.f32.gmra.mrb[0].mxu0 %v1935
    %v1937 = vpop.f32.mrb[0].mxu0
    %v1938 = vadd.f32 %v1827, %v1937
    %v1939 = vpop.f32.mrb[0].mxu0
    %v1940 = vand.u32 %v47, 4294901760
    %1941 = vmatprep.mubr.f32.mxu0 %v1940
    %v1942 = vand.u32 %v46, 4294901760
    %1943 = vmatmul.mubr.f32.gmra.mrb[0].mxu0 %v1942
    %v1944 = vpop.f32.mrb[0].mxu0
    %v1945 = vadd.f32 %v1834, %v1944
    %v1946 = vpop.f32.mrb[0].mxu0
    %1947 = vdwg.mxu0
    %v1948 = vmul.f32 %v1938, -0.5
    %v1949 = vmul.f32 %v1945, -0.5
    %v1950 = vmul.f32 %v1948, %v1938
    %v1951 = vmul.f32 %v1949, %v1945
    %1952 = vst [vmem:[#allocation7] sm:$0xff] %v1950
    %1953 = vst [vmem:[#allocation7 + $0x8] sm:$0xff] %v1951
    // Predicated region
    $region18: #{tpu_custom_call.1} parent=1 // pred_check
      _
    $region19: #{tpu_custom_call.1} parent=1 // pred_check_branch
      %1955 = sbr.rel (0) target = $region21
    $region20: #{tpu_custom_call.1} parent=1 // pred_region
      %s1957 = ssub.s32 256, 256
      %1958 = vsyncadd [#allocation4], %s1957
      %s1959 = sshll.u32 [#allocation7], 4
      %s1960 = int_to_ptr.vmem [resolvable:$true] %s1959
      %1965 = dma.vmem_to_hbm [thread:$0]  %s1960, 256, %s2, [#allocation4], 128, 128, 8
    $region21: #{tpu_custom_call.1} parent=1 // pred_fallthru
      _
    // Predicated region
    $region22: #{tpu_custom_call.1} parent=1 // pred_check
      _
    $region23: #{tpu_custom_call.1} parent=1 // pred_check_branch
      %1967 = sbr.rel (0) target = $region25
    $region24: #{tpu_custom_call.1} parent=1 // pred_region
      %1968 = dma.done [#allocation4], 256
    $region25: #{tpu_custom_call.1} parent=1 // pred_fallthru
      _
    %1969 = vsyncpa [#allocation3], 1
    %1970 = vsyncpa [#allocation6], 1
    %1971 = vsyncpa [#allocation4], 1

</llo_original>
